<compile_context>
chip_gen: v7x
topology: tpu7x:2x2x1
jax: 0.10.0
libtpu: 0.0.40
codegen_flags: <defaults>
</compile_context>

<pallas_src>
import functools

import jax
import jax.numpy as jnp
from jax.experimental import pallas as pl


def _dot(a, b):
    return jnp.dot(a, b, preferred_element_type=jnp.float32)


def _softmax_last(x):
    m = jnp.max(x, axis=-1, keepdims=True)
    e = jnp.exp(x - m)
    return e * pl.reciprocal(jnp.sum(e, axis=-1, keepdims=True), approx=True)


def _cell_kernel(
    B, N, Fh, return_interpret,
    # --- batched inputs, batch flattened onto sublanes ---
    inp_ref, state_ref,                          # [B*N, 3], [B*N, Fh]
    # --- DoubleDGC core (pre-combined / pre-transposed constants) ---
    aw2_0t_ref, aw2_1t_ref,                      # [N, N]   (A*w2[0]).T, (Badj*w2[1]).T
    add1_ref, add2_ref,                          # [N, N]   bias_core[k] - 1e16*(1-adj)
    # --- fused node-wise weights (host-concatenated along lanes) ---
    w_inp_all_ref,                               # [3, 3*Fh]       [W_in | W_r[:3] | W_u[:3]]
    b_in_ref,                                    # [1, Fh]
    w_x_all_ref,                                 # [Fh, 2N+2+Fh]   [w1[0,:Fh]|w1[1,:Fh]|Wcv[:Fh]|W_c[:Fh]]
    w_state_all_ref,                             # [Fh, 2N+2+2Fh]  [w1[0,Fh:]|w1[1,Fh:]|Wcv[Fh:]|W_r[3:]|W_u[3:]]
    bconv_ref,                                   # [1, 2]
    # --- gates (LocalGC + Linear, constants folded) ---
    aw1rt_ref, br_ref,                           # [N, N], [1, Fh]
    aw1ut_ref, bu_ref,                           # [N, N], [1, Fh]
    aw1ct_ref, wcs_ref, bc_ref,                  # [N, N], [Fh, Fh], [1, Fh]
    # --- outputs ---
    p_ref, H_ref,                                # [B*N, 2], [B*N, Fh]
    *interp_refs,                                # optionally (mask1 [B,N,N], mask2 [B,N,N], dem [B*N,1])
):
    inp = inp_ref[...]
    state = state_ref[...]
    inp2 = inp[:, :2]

    # ---- node-wise (batch-flat) matmuls, once for the whole batch ----
    iall = _dot(inp, w_inp_all_ref[...])                                  # [B*N, 3*Fh]
    sall = _dot(state, w_state_all_ref[...])                              # [B*N, 2N+2+2Fh]
    x = iall[:, :Fh] + b_in_ref[...]                                      # lin_in        [B*N, Fh]
    xall = _dot(x, w_x_all_ref[...])                                      # [B*N, 2N+2+Fh]

    g1 = xall[:, :N] + sall[:, :N]                                        # gru_in @ w1[0]  [B*N, N]
    g2 = xall[:, N:2 * N] + sall[:, N:2 * N]                              # gru_in @ w1[1]  [B*N, N]
    demand = jnp.tanh(
        xall[:, 2 * N:2 * N + 2] + sall[:, 2 * N:2 * N + 2] + bconv_ref[...]
    ) * 0.5                                                               # convert         [B*N, 2]
    cx = xall[:, 2 * N + 2:2 * N + 2 + Fh]                                # x-part of feat_c @ W_c
    rin = iall[:, Fh:2 * Fh] + sall[:, 2 * N + 2:2 * N + 2 + Fh]          # feat_ru @ W_r   [B*N, Fh]
    uin = iall[:, 2 * Fh:3 * Fh] + sall[:, 2 * N + 2 + Fh:2 * N + 2 + 2 * Fh]  # feat_ru @ W_u

    aw2_0t = aw2_0t_ref[...]
    aw2_1t = aw2_1t_ref[...]
    add1 = add1_ref[...]
    add2 = add2_ref[...]
    aw1rt = aw1rt_ref[...]
    aw1ut = aw1ut_ref[...]
    aw1ct = aw1ct_ref[...]
    wcs = wcs_ref[...]
    br = br_ref[...]
    bu = bu_ref[...]
    bc = bc_ref[...]

    col2 = jax.lax.broadcasted_iota(jnp.int32, (N, 2), 1)

    # ---- per-batch graph ops ([N,N] attention + graph conv), static unroll ----
    for b in range(B):
        lo, hi = b * N, (b + 1) * N
        st_b = state[lo:hi, :]

        m1 = _softmax_last(_dot(aw2_0t, g1[lo:hi, :]) + add1)             # [N, N]
        m2 = _softmax_last(_dot(aw2_1t, g2[lo:hi, :]) + add2)             # [N, N]

        vq1 = _dot(m1, inp2[lo:hi, :])      # column 0 = v = mask1 @ input[..., :1]
        vq2 = _dot(m2, inp2[lo:hi, :])      # column 1 = q = mask2 @ input[..., 1:2]
        p_b = jnp.where(col2 == 0, vq1, vq2) + demand[lo:hi, :]

        r = jax.nn.sigmoid(_dot(aw1rt, rin[lo:hi, :]) + br)
        u = jax.nn.sigmoid(_dot(aw1ut, uin[lo:hi, :]) + bu)
        s = r * st_b
        c = jnp.tanh(_dot(aw1ct, cx[lo:hi, :] + _dot(s, wcs)) + bc)
        H_b = u * st_b + (1.0 - u) * c

        p_ref[lo:hi, :] = p_b
        H_ref[lo:hi, :] = H_b
        if return_interpret:
            mask1_ref, mask2_ref, _ = interp_refs
            mask1_ref[b, :, :] = m1
            mask2_ref[b, :, :] = m2

    if return_interpret:
        _, _, dem_ref = interp_refs
        dem_ref[...] = demand[:, 1:2]       # demand[..., -1]


_WEIGHT_ORDER = (
    "aw2_0t", "aw2_1t", "add1", "add2",
    "w_inp_all", "b_in", "w_x_all", "w_state_all", "bconv",
    "aw1rt", "br", "aw1ut", "bu", "aw1ct", "wcs", "bc",
)


def preprocess_params(params):
    """Hoist all input-independent math out of the kernel (runs once)."""
    A = params["A"]
    Badj = params["Badj"]
    w1 = params["w1"]
    W_c = params["W_c"]
    F = w1.shape[1]
    Fh = F // 2
    prep = dict(
        aw2_0t=(A * params["w2"][0]).T,
        aw2_1t=(Badj * params["w2"][1]).T,
        add1=params["bias_core"][0] + (-1e16) * (1.0 - A),
        add2=params["bias_core"][1] + (-1e16) * (1.0 - Badj),
        # fused node-wise weights (lane-concatenated)
        w_inp_all=jnp.concatenate(
            [params["W_in"], params["W_r"][:3], params["W_u"][:3]], axis=1),
        b_in=params["b_in"],
        w_x_all=jnp.concatenate(
            [w1[0, :Fh], w1[1, :Fh], params["W_convert"][:Fh], W_c[:Fh]], axis=1),
        w_state_all=jnp.concatenate(
            [w1[0, Fh:], w1[1, Fh:], params["W_convert"][Fh:],
             params["W_r"][3:], params["W_u"][3:]], axis=1),
        bconv=params["b_convert"],
        # gates (LocalGC weight pre-masked & transposed, biases folded through lin_*)
        aw1rt=(A * params["w1_r"]).T,
        br=params["bias_r"] @ params["W_r"] + params["b_r"],
        aw1ut=(A * params["w1_u"]).T,
        bu=params["bias_u"] @ params["W_u"] + params["b_u"],
        aw1ct=(A * params["w1_c"]).T,
        wcs=W_c[Fh:],
        bc=params["bias_c"] @ params["W_c"] + params["b_c"],
    )
    return {k: v.astype(jnp.float32) for k, v in prep.items()}


def dgcn_cell_uqr(prep, inp, state, return_interpret=False):
    """DGCNcellUQr.forward.  inp: [B, N, 3], state: [B, N, F//2]."""
    B, N, Ci = inp.shape
    Fh = state.shape[-1]
    assert Ci == 3

    inp_f = inp.reshape(B * N, Ci).astype(jnp.float32)
    state_f = state.reshape(B * N, Fh).astype(jnp.float32)
    weights = [prep[k] for k in _WEIGHT_ORDER]

    out_shape = [
        jax.ShapeDtypeStruct((B * N, 2), jnp.float32),     # p
        jax.ShapeDtypeStruct((B * N, Fh), jnp.float32),    # H
    ]
    if return_interpret:
        out_shape += [
            jax.ShapeDtypeStruct((B, N, N), jnp.float32),   # mask1
            jax.ShapeDtypeStruct((B, N, N), jnp.float32),   # mask2
            jax.ShapeDtypeStruct((B * N, 1), jnp.float32),  # demand[..., -1]
        ]

    outs = pl.pallas_call(
        functools.partial(_cell_kernel, B, N, Fh, return_interpret),
        out_shape=out_shape,
    )(inp_f, state_f, *weights)

    p = outs[0].reshape(B, N, 2)
    H = outs[1].reshape(B, N, Fh)
    if return_interpret:
        return p, H, outs[2], outs[3], outs[4].reshape(B, N)
    return p, H


@functools.partial(jax.jit, static_argnames=("return_interpret",))
def forward(prep, inp, state, return_interpret=False):
    return dgcn_cell_uqr(prep, inp, state, return_interpret=return_interpret)


# ----------------------------------------------------------------------------
# Pure-JAX transcription of the PyTorch module (correctness reference only).
# ----------------------------------------------------------------------------
def reference_forward(params, inp, state):
    A = params["A"]
    Badj = params["Badj"]
    x = inp @ params["W_in"] + params["b_in"]
    gru_input = jnp.concatenate([x, state], -1)
    # DoubleDGC core, called as core(gru_input, input[..., :2])
    demand = jnp.tanh(gru_input @ params["W_convert"] + params["b_convert"]) * 0.5
    x1 = jnp.swapaxes(gru_input, -1, -2) @ (A * params["w2"][0])
    mask1 = jnp.swapaxes(x1, -1, -2) @ params["w1"][0] + params["bias_core"][0]
    mask1 = jax.nn.softmax(mask1 + (-1e16) * (1.0 - A), axis=-1)
    x2 = jnp.swapaxes(gru_input, -1, -2) @ (Badj * params["w2"][1])
    mask2 = jnp.swapaxes(x2, -1, -2) @ params["w1"][1] + params["bias_core"][1]
    mask2 = jax.nn.softmax(mask2 + (-1e16) * (1.0 - Badj), axis=-1)
    inp2 = inp[..., :2]
    v = mask1 @ inp2[..., :1]
    q = mask2 @ inp2[..., 1:]
    p = jnp.concatenate([v, q], -1) + demand

    def local_gc(w1, bias, feat):
        W = A * w1
        return jnp.swapaxes(jnp.swapaxes(feat, -1, -2) @ W, -1, -2) + bias

    feature_ru = jnp.concatenate([inp, state], -1)
    r = jax.nn.sigmoid(local_gc(params["w1_r"], params["bias_r"], feature_ru)
                       @ params["W_r"] + params["b_r"])
    u = jax.nn.sigmoid(local_gc(params["w1_u"], params["bias_u"], feature_ru)
                       @ params["W_u"] + params["b_u"])
    s = r * state
    feature_c = jnp.concatenate([x, s], -1)
    c = jnp.tanh(local_gc(params["w1_c"], params["bias_c"], feature_c)
                 @ params["W_c"] + params["b_c"])
    H = u * state + (1.0 - u) * c
    return p, H, mask1, mask2, demand[..., -1]


def init_params(key, N, F):
    Fh = F // 2
    dim = Fh + 3                      # feature_ru = cat([input(3), state(Fh)])
    keys = iter(jax.random.split(key, 32))

    def nrm(shape, scale=0.1):
        return scale * jax.random.normal(next(keys), shape, dtype=jnp.float32)

    A = (jax.random.uniform(next(keys), (N, N)) < 0.3).astype(jnp.float32)
    A = jnp.maximum(A, jnp.eye(N, dtype=jnp.float32))
    Badj = (jax.random.uniform(next(keys), (N, N)) < 0.3).astype(jnp.float32)
    Badj = jnp.maximum(Badj, jnp.eye(N, dtype=jnp.float32))

    return dict(
        A=A, Badj=Badj,
        # DoubleDGC core
        w1=nrm((2, F, N)),
        w2=nrm((2, N, N)),
        bias_core=nrm((2, N, 1), 0.05),
        W_convert=nrm((F, 2)), b_convert=nrm((1, 2), 0.05),
        # lin_in: Linear(3, F//2)
        W_in=nrm((3, Fh)), b_in=nrm((1, Fh), 0.05),
        # dgc_r / lin_r
        w1_r=nrm((N, N)), bias_r=nrm((1, dim), 0.05),
        W_r=nrm((dim, Fh)), b_r=nrm((1, Fh), 0.05),
        # dgc_u / lin_u
        w1_u=nrm((N, N)), bias_u=nrm((1, dim), 0.05),
        W_u=nrm((dim, Fh)), b_u=nrm((1, Fh), 0.05),
        # dgc_c / lin_c
        w1_c=nrm((N, N)), bias_c=nrm((1, F), 0.05),
        W_c=nrm((F, Fh)), b_c=nrm((1, Fh), 0.05),
    )


if __name__ == "__main__":
    N, F, B = 16, 8, 2               # nb_node, dim_feature, batch
    Fh = F // 2
    key = jax.random.PRNGKey(0)
    kp, ki, ks = jax.random.split(key, 3)
    params = init_params(kp, N, F)
    prep = preprocess_params(params)

    inp = jax.random.normal(ki, (B, N, 3), dtype=jnp.float32)
    state = jax.random.normal(ks, (B, N, Fh), dtype=jnp.float32)

    # default config (uncertainty=False, return_interpret=False): returns (p, H)
    p, H = forward(prep, inp, state, return_interpret=False)
    # interpret config: also returns mask1, mask2, demand[..., -1]
    p_i, H_i, m1, m2, dem = forward(prep, inp, state, return_interpret=True)
    jax.block_until_ready((p, H, p_i, H_i, m1, m2, dem))

    assert p.shape == (B, N, 2) and H.shape == (B, N, Fh)
    assert m1.shape == (B, N, N) and m2.shape == (B, N, N) and dem.shape == (B, N)

    # check against the pure-JAX transcription of the PyTorch forward
    with jax.default_matmul_precision("highest"):
        p_r, H_r, m1_r, m2_r, dem_r = reference_forward(params, inp, state)
    tol = dict(atol=5e-3, rtol=5e-3)
    assert jnp.allclose(p, p_r, **tol), float(jnp.max(jnp.abs(p - p_r)))
    assert jnp.allclose(H, H_r, **tol), float(jnp.max(jnp.abs(H - H_r)))
    assert jnp.allclose(p_i, p_r, **tol) and jnp.allclose(H_i, H_r, **tol)
    assert jnp.allclose(m1, m1_r, **tol), float(jnp.max(jnp.abs(m1 - m1_r)))
    assert jnp.allclose(m2, m2_r, **tol), float(jnp.max(jnp.abs(m2 - m2_r)))
    assert jnp.allclose(dem, dem_r, **tol)
    assert bool(jnp.all(jnp.isfinite(p))) and bool(jnp.all(jnp.isfinite(H)))
    print("KERNEL_OK")
</pallas_src>

<mosaic_0001>
module attributes {stable_mosaic.version = 11 : i64} {
  func.func @_cell_kernel(%arg0: memref<32x3xf32, #tpu.memory_space<vmem>>, %arg1: memref<32x4xf32, #tpu.memory_space<vmem>>, %arg2: memref<16x16xf32, #tpu.memory_space<vmem>>, %arg3: memref<16x16xf32, #tpu.memory_space<vmem>>, %arg4: memref<16x16xf32, #tpu.memory_space<vmem>>, %arg5: memref<16x16xf32, #tpu.memory_space<vmem>>, %arg6: memref<3x12xf32, #tpu.memory_space<vmem>>, %arg7: memref<1x4xf32, #tpu.memory_space<vmem>>, %arg8: memref<4x38xf32, #tpu.memory_space<vmem>>, %arg9: memref<4x42xf32, #tpu.memory_space<vmem>>, %arg10: memref<1x2xf32, #tpu.memory_space<vmem>>, %arg11: memref<16x16xf32, #tpu.memory_space<vmem>>, %arg12: memref<1x4xf32, #tpu.memory_space<vmem>>, %arg13: memref<16x16xf32, #tpu.memory_space<vmem>>, %arg14: memref<1x4xf32, #tpu.memory_space<vmem>>, %arg15: memref<16x16xf32, #tpu.memory_space<vmem>>, %arg16: memref<4x4xf32, #tpu.memory_space<vmem>>, %arg17: memref<1x4xf32, #tpu.memory_space<vmem>>, %arg18: memref<32x2xf32, #tpu.memory_space<vmem>>, %arg19: memref<32x4xf32, #tpu.memory_space<vmem>>) attributes {dimension_semantics = [], scalar_prefetch = 0 : i64, scratch_operands = 0 : i64, tpu.core_type = #tpu.core_type<tc>} {
    %c0 = arith.constant 0 : index
    %c0_0 = arith.constant 0 : index
    %0 = vector.load %arg0[%c0, %c0_0] : memref<32x3xf32, #tpu.memory_space<vmem>>, vector<32x3xf32>
    %c0_1 = arith.constant 0 : index
    %c0_2 = arith.constant 0 : index
    %1 = vector.load %arg1[%c0_1, %c0_2] : memref<32x4xf32, #tpu.memory_space<vmem>>, vector<32x4xf32>
    %2 = vector.extract_strided_slice %0 {offsets = [0, 0], sizes = [32, 2], strides = [1, 1]} : vector<32x3xf32> to vector<32x2xf32>
    %c0_3 = arith.constant 0 : index
    %c0_4 = arith.constant 0 : index
    %3 = vector.load %arg6[%c0_3, %c0_4] : memref<3x12xf32, #tpu.memory_space<vmem>>, vector<3x12xf32>
    %cst = arith.constant dense<0.000000e+00> : vector<32x12xf32>
    %4 = tpu.matmul %0, %3, %cst {dimension_numbers = #tpu.dot_dimension_numbers<[1], [0], [0], [1], [0, 0, 1, 1], [], []>} : vector<32x3xf32>, vector<3x12xf32>, vector<32x12xf32> -> vector<32x12xf32>
    %c0_5 = arith.constant 0 : index
    %c0_6 = arith.constant 0 : index
    %5 = vector.load %arg9[%c0_5, %c0_6] : memref<4x42xf32, #tpu.memory_space<vmem>>, vector<4x42xf32>
    %cst_7 = arith.constant dense<0.000000e+00> : vector<32x42xf32>
    %6 = tpu.matmul %1, %5, %cst_7 {dimension_numbers = #tpu.dot_dimension_numbers<[1], [0], [0], [1], [0, 0, 1, 1], [], []>} : vector<32x4xf32>, vector<4x42xf32>, vector<32x42xf32> -> vector<32x42xf32>
    %7 = vector.extract_strided_slice %4 {offsets = [0, 0], sizes = [32, 4], strides = [1, 1]} : vector<32x12xf32> to vector<32x4xf32>
    %c0_8 = arith.constant 0 : index
    %c0_9 = arith.constant 0 : index
    %8 = vector.load %arg7[%c0_8, %c0_9] : memref<1x4xf32, #tpu.memory_space<vmem>>, vector<1x4xf32>
    %9 = vector.broadcast %8 : vector<1x4xf32> to vector<32x4xf32>
    %10 = arith.addf %7, %9 : vector<32x4xf32>
    %c0_10 = arith.constant 0 : index
    %c0_11 = arith.constant 0 : index
    %11 = vector.load %arg8[%c0_10, %c0_11] : memref<4x38xf32, #tpu.memory_space<vmem>>, vector<4x38xf32>
    %cst_12 = arith.constant dense<0.000000e+00> : vector<32x38xf32>
    %12 = tpu.matmul %10, %11, %cst_12 {dimension_numbers = #tpu.dot_dimension_numbers<[1], [0], [0], [1], [0, 0, 1, 1], [], []>} : vector<32x4xf32>, vector<4x38xf32>, vector<32x38xf32> -> vector<32x38xf32>
    %13 = vector.extract_strided_slice %12 {offsets = [0, 0], sizes = [32, 16], strides = [1, 1]} : vector<32x38xf32> to vector<32x16xf32>
    %14 = vector.extract_strided_slice %6 {offsets = [0, 0], sizes = [32, 16], strides = [1, 1]} : vector<32x42xf32> to vector<32x16xf32>
    %15 = arith.addf %13, %14 : vector<32x16xf32>
    %16 = vector.extract_strided_slice %12 {offsets = [0, 16], sizes = [32, 16], strides = [1, 1]} : vector<32x38xf32> to vector<32x16xf32>
    %17 = vector.extract_strided_slice %6 {offsets = [0, 16], sizes = [32, 16], strides = [1, 1]} : vector<32x42xf32> to vector<32x16xf32>
    %18 = arith.addf %16, %17 : vector<32x16xf32>
    %19 = vector.extract_strided_slice %12 {offsets = [0, 32], sizes = [32, 2], strides = [1, 1]} : vector<32x38xf32> to vector<32x2xf32>
    %20 = vector.extract_strided_slice %6 {offsets = [0, 32], sizes = [32, 2], strides = [1, 1]} : vector<32x42xf32> to vector<32x2xf32>
    %21 = arith.addf %19, %20 : vector<32x2xf32>
    %c0_13 = arith.constant 0 : index
    %c0_14 = arith.constant 0 : index
    %22 = vector.load %arg10[%c0_13, %c0_14] : memref<1x2xf32, #tpu.memory_space<vmem>>, vector<1x2xf32>
    %23 = vector.broadcast %22 : vector<1x2xf32> to vector<32x2xf32>
    %24 = arith.addf %21, %23 : vector<32x2xf32>
    %25 = math.tanh %24 : vector<32x2xf32>
    %cst_15 = arith.constant 5.000000e-01 : f32
    %26 = vector.broadcast %cst_15 : f32 to vector<32x2xf32>
    %27 = arith.mulf %25, %26 : vector<32x2xf32>
    %28 = vector.extract_strided_slice %12 {offsets = [0, 34], sizes = [32, 4], strides = [1, 1]} : vector<32x38xf32> to vector<32x4xf32>
    %29 = vector.extract_strided_slice %4 {offsets = [0, 4], sizes = [32, 4], strides = [1, 1]} : vector<32x12xf32> to vector<32x4xf32>
    %30 = vector.extract_strided_slice %6 {offsets = [0, 34], sizes = [32, 4], strides = [1, 1]} : vector<32x42xf32> to vector<32x4xf32>
    %31 = arith.addf %29, %30 : vector<32x4xf32>
    %32 = vector.extract_strided_slice %4 {offsets = [0, 8], sizes = [32, 4], strides = [1, 1]} : vector<32x12xf32> to vector<32x4xf32>
    %33 = vector.extract_strided_slice %6 {offsets = [0, 38], sizes = [32, 4], strides = [1, 1]} : vector<32x42xf32> to vector<32x4xf32>
    %34 = arith.addf %32, %33 : vector<32x4xf32>
    %c0_16 = arith.constant 0 : index
    %c0_17 = arith.constant 0 : index
    %35 = vector.load %arg2[%c0_16, %c0_17] : memref<16x16xf32, #tpu.memory_space<vmem>>, vector<16x16xf32>
    %c0_18 = arith.constant 0 : index
    %c0_19 = arith.constant 0 : index
    %36 = vector.load %arg3[%c0_18, %c0_19] : memref<16x16xf32, #tpu.memory_space<vmem>>, vector<16x16xf32>
    %c0_20 = arith.constant 0 : index
    %c0_21 = arith.constant 0 : index
    %37 = vector.load %arg4[%c0_20, %c0_21] : memref<16x16xf32, #tpu.memory_space<vmem>>, vector<16x16xf32>
    %c0_22 = arith.constant 0 : index
    %c0_23 = arith.constant 0 : index
    %38 = vector.load %arg5[%c0_22, %c0_23] : memref<16x16xf32, #tpu.memory_space<vmem>>, vector<16x16xf32>
    %c0_24 = arith.constant 0 : index
    %c0_25 = arith.constant 0 : index
    %39 = vector.load %arg11[%c0_24, %c0_25] : memref<16x16xf32, #tpu.memory_space<vmem>>, vector<16x16xf32>
    %c0_26 = arith.constant 0 : index
    %c0_27 = arith.constant 0 : index
    %40 = vector.load %arg13[%c0_26, %c0_27] : memref<16x16xf32, #tpu.memory_space<vmem>>, vector<16x16xf32>
    %c0_28 = arith.constant 0 : index
    %c0_29 = arith.constant 0 : index
    %41 = vector.load %arg15[%c0_28, %c0_29] : memref<16x16xf32, #tpu.memory_space<vmem>>, vector<16x16xf32>
    %c0_30 = arith.constant 0 : index
    %c0_31 = arith.constant 0 : index
    %42 = vector.load %arg16[%c0_30, %c0_31] : memref<4x4xf32, #tpu.memory_space<vmem>>, vector<4x4xf32>
    %c0_32 = arith.constant 0 : index
    %c0_33 = arith.constant 0 : index
    %43 = vector.load %arg12[%c0_32, %c0_33] : memref<1x4xf32, #tpu.memory_space<vmem>>, vector<1x4xf32>
    %c0_34 = arith.constant 0 : index
    %c0_35 = arith.constant 0 : index
    %44 = vector.load %arg14[%c0_34, %c0_35] : memref<1x4xf32, #tpu.memory_space<vmem>>, vector<1x4xf32>
    %c0_36 = arith.constant 0 : index
    %c0_37 = arith.constant 0 : index
    %45 = vector.load %arg17[%c0_36, %c0_37] : memref<1x4xf32, #tpu.memory_space<vmem>>, vector<1x4xf32>
    %46 = tpu.iota {dimensions = array<i32: 1>} : vector<16x2xi32>
    %47 = vector.extract_strided_slice %1 {offsets = [0, 0], sizes = [16, 4], strides = [1, 1]} : vector<32x4xf32> to vector<16x4xf32>
    %48 = vector.extract_strided_slice %15 {offsets = [0, 0], sizes = [16, 16], strides = [1, 1]} : vector<32x16xf32> to vector<16x16xf32>
    %cst_38 = arith.constant dense<0.000000e+00> : vector<16x16xf32>
    %49 = tpu.matmul %35, %48, %cst_38 {dimension_numbers = #tpu.dot_dimension_numbers<[1], [0], [0], [1], [0, 0, 1, 1], [], []>} : vector<16x16xf32>, vector<16x16xf32>, vector<16x16xf32> -> vector<16x16xf32>
    %50 = arith.addf %49, %37 : vector<16x16xf32>
    %cst_39 = arith.constant dense<0xFF800000> : vector<16xf32>
    %51 = vector.multi_reduction <maximumf>, %50, %cst_39 [1] : vector<16x16xf32> to vector<16xf32>
    %52 = vector.shape_cast %51 : vector<16xf32> to vector<16x1xf32>
    %53 = vector.broadcast %52 : vector<16x1xf32> to vector<16x16xf32>
    %54 = arith.subf %50, %53 : vector<16x16xf32>
    %55 = math.exp %54 : vector<16x16xf32>
    %cst_40 = arith.constant dense<0.000000e+00> : vector<16xf32>
    %56 = vector.multi_reduction <add>, %55, %cst_40 [1] : vector<16x16xf32> to vector<16xf32>
    %57 = vector.shape_cast %56 : vector<16xf32> to vector<16x1xf32>
    %58 = tpu.reciprocal %57 {approx = true} : vector<16x1xf32> -> vector<16x1xf32>
    %59 = vector.broadcast %58 : vector<16x1xf32> to vector<16x16xf32>
    %60 = arith.mulf %55, %59 : vector<16x16xf32>
    %61 = vector.extract_strided_slice %18 {offsets = [0, 0], sizes = [16, 16], strides = [1, 1]} : vector<32x16xf32> to vector<16x16xf32>
    %cst_41 = arith.constant dense<0.000000e+00> : vector<16x16xf32>
    %62 = tpu.matmul %36, %61, %cst_41 {dimension_numbers = #tpu.dot_dimension_numbers<[1], [0], [0], [1], [0, 0, 1, 1], [], []>} : vector<16x16xf32>, vector<16x16xf32>, vector<16x16xf32> -> vector<16x16xf32>
    %63 = arith.addf %62, %38 : vector<16x16xf32>
    %cst_42 = arith.constant dense<0xFF800000> : vector<16xf32>
    %64 = vector.multi_reduction <maximumf>, %63, %cst_42 [1] : vector<16x16xf32> to vector<16xf32>
    %65 = vector.shape_cast %64 : vector<16xf32> to vector<16x1xf32>
    %66 = vector.broadcast %65 : vector<16x1xf32> to vector<16x16xf32>
    %67 = arith.subf %63, %66 : vector<16x16xf32>
    %68 = math.exp %67 : vector<16x16xf32>
    %cst_43 = arith.constant dense<0.000000e+00> : vector<16xf32>
    %69 = vector.multi_reduction <add>, %68, %cst_43 [1] : vector<16x16xf32> to vector<16xf32>
    %70 = vector.shape_cast %69 : vector<16xf32> to vector<16x1xf32>
    %71 = tpu.reciprocal %70 {approx = true} : vector<16x1xf32> -> vector<16x1xf32>
    %72 = vector.broadcast %71 : vector<16x1xf32> to vector<16x16xf32>
    %73 = arith.mulf %68, %72 : vector<16x16xf32>
    %74 = vector.extract_strided_slice %2 {offsets = [0, 0], sizes = [16, 2], strides = [1, 1]} : vector<32x2xf32> to vector<16x2xf32>
    %cst_44 = arith.constant dense<0.000000e+00> : vector<16x2xf32>
    %75 = tpu.matmul %60, %74, %cst_44 {dimension_numbers = #tpu.dot_dimension_numbers<[1], [0], [0], [1], [0, 0, 1, 1], [], []>} : vector<16x16xf32>, vector<16x2xf32>, vector<16x2xf32> -> vector<16x2xf32>
    %76 = vector.extract_strided_slice %2 {offsets = [0, 0], sizes = [16, 2], strides = [1, 1]} : vector<32x2xf32> to vector<16x2xf32>
    %cst_45 = arith.constant dense<0.000000e+00> : vector<16x2xf32>
    %77 = tpu.matmul %73, %76, %cst_45 {dimension_numbers = #tpu.dot_dimension_numbers<[1], [0], [0], [1], [0, 0, 1, 1], [], []>} : vector<16x16xf32>, vector<16x2xf32>, vector<16x2xf32> -> vector<16x2xf32>
    %c0_i32 = arith.constant 0 : i32
    %78 = vector.broadcast %c0_i32 : i32 to vector<16x2xi32>
    %79 = arith.cmpi eq, %46, %78 : vector<16x2xi32>
    %80 = arith.select %79, %75, %77 : vector<16x2xi1>, vector<16x2xf32>
    %81 = vector.extract_strided_slice %27 {offsets = [0, 0], sizes = [16, 2], strides = [1, 1]} : vector<32x2xf32> to vector<16x2xf32>
    %82 = arith.addf %80, %81 : vector<16x2xf32>
    %83 = vector.extract_strided_slice %31 {offsets = [0, 0], sizes = [16, 4], strides = [1, 1]} : vector<32x4xf32> to vector<16x4xf32>
    %cst_46 = arith.constant dense<0.000000e+00> : vector<16x4xf32>
    %84 = tpu.matmul %39, %83, %cst_46 {dimension_numbers = #tpu.dot_dimension_numbers<[1], [0], [0], [1], [0, 0, 1, 1], [], []>} : vector<16x16xf32>, vector<16x4xf32>, vector<16x4xf32> -> vector<16x4xf32>
    %85 = vector.broadcast %43 : vector<1x4xf32> to vector<16x4xf32>
    %86 = arith.addf %84, %85 : vector<16x4xf32>
    %87 = arith.negf %86 : vector<16x4xf32>
    %88 = math.exp %87 : vector<16x4xf32>
    %cst_47 = arith.constant 1.000000e+00 : f32
    %89 = vector.broadcast %cst_47 : f32 to vector<16x4xf32>
    %90 = arith.addf %89, %88 : vector<16x4xf32>
    %91 = arith.divf %89, %90 : vector<16x4xf32>
    %92 = vector.extract_strided_slice %34 {offsets = [0, 0], sizes = [16, 4], strides = [1, 1]} : vector<32x4xf32> to vector<16x4xf32>
    %cst_48 = arith.constant dense<0.000000e+00> : vector<16x4xf32>
    %93 = tpu.matmul %40, %92, %cst_48 {dimension_numbers = #tpu.dot_dimension_numbers<[1], [0], [0], [1], [0, 0, 1, 1], [], []>} : vector<16x16xf32>, vector<16x4xf32>, vector<16x4xf32> -> vector<16x4xf32>
    %94 = vector.broadcast %44 : vector<1x4xf32> to vector<16x4xf32>
    %95 = arith.addf %93, %94 : vector<16x4xf32>
    %96 = arith.negf %95 : vector<16x4xf32>
    %97 = math.exp %96 : vector<16x4xf32>
    %cst_49 = arith.constant 1.000000e+00 : f32
    %98 = vector.broadcast %cst_49 : f32 to vector<16x4xf32>
    %99 = arith.addf %98, %97 : vector<16x4xf32>
    %100 = arith.divf %98, %99 : vector<16x4xf32>
    %101 = arith.mulf %91, %47 : vector<16x4xf32>
    %102 = vector.extract_strided_slice %28 {offsets = [0, 0], sizes = [16, 4], strides = [1, 1]} : vector<32x4xf32> to vector<16x4xf32>
    %cst_50 = arith.constant dense<0.000000e+00> : vector<16x4xf32>
    %103 = tpu.matmul %101, %42, %cst_50 {dimension_numbers = #tpu.dot_dimension_numbers<[1], [0], [0], [1], [0, 0, 1, 1], [], []>} : vector<16x4xf32>, vector<4x4xf32>, vector<16x4xf32> -> vector<16x4xf32>
    %104 = arith.addf %102, %103 : vector<16x4xf32>
    %cst_51 = arith.constant dense<0.000000e+00> : vector<16x4xf32>
    %105 = tpu.matmul %41, %104, %cst_51 {dimension_numbers = #tpu.dot_dimension_numbers<[1], [0], [0], [1], [0, 0, 1, 1], [], []>} : vector<16x16xf32>, vector<16x4xf32>, vector<16x4xf32> -> vector<16x4xf32>
    %106 = vector.broadcast %45 : vector<1x4xf32> to vector<16x4xf32>
    %107 = arith.addf %105, %106 : vector<16x4xf32>
    %108 = math.tanh %107 : vector<16x4xf32>
    %109 = arith.mulf %100, %47 : vector<16x4xf32>
    %cst_52 = arith.constant 1.000000e+00 : f32
    %110 = vector.broadcast %cst_52 : f32 to vector<16x4xf32>
    %111 = arith.subf %110, %100 : vector<16x4xf32>
    %112 = arith.mulf %111, %108 : vector<16x4xf32>
    %113 = arith.addf %109, %112 : vector<16x4xf32>
    %c0_53 = arith.constant 0 : index
    %c0_54 = arith.constant 0 : index
    %114 = vector.load %arg18[%c0_53, %c0_54] : memref<32x2xf32, #tpu.memory_space<vmem>>, vector<16x2xf32>
    tpu.vector_store %arg18[%c0_53, %c0_54], %82 {strides = array<i32>} : memref<32x2xf32, #tpu.memory_space<vmem>>, vector<16x2xf32>,
    %c0_55 = arith.constant 0 : index
    %c0_56 = arith.constant 0 : index
    %115 = vector.load %arg19[%c0_55, %c0_56] : memref<32x4xf32, #tpu.memory_space<vmem>>, vector<16x4xf32>
    tpu.vector_store %arg19[%c0_55, %c0_56], %113 {strides = array<i32>} : memref<32x4xf32, #tpu.memory_space<vmem>>, vector<16x4xf32>,
    %116 = vector.extract_strided_slice %1 {offsets = [16, 0], sizes = [16, 4], strides = [1, 1]} : vector<32x4xf32> to vector<16x4xf32>
    %117 = vector.extract_strided_slice %15 {offsets = [16, 0], sizes = [16, 16], strides = [1, 1]} : vector<32x16xf32> to vector<16x16xf32>
    %cst_57 = arith.constant dense<0.000000e+00> : vector<16x16xf32>
    %118 = tpu.matmul %35, %117, %cst_57 {dimension_numbers = #tpu.dot_dimension_numbers<[1], [0], [0], [1], [0, 0, 1, 1], [], []>} : vector<16x16xf32>, vector<16x16xf32>, vector<16x16xf32> -> vector<16x16xf32>
    %119 = arith.addf %118, %37 : vector<16x16xf32>
    %cst_58 = arith.constant dense<0xFF800000> : vector<16xf32>
    %120 = vector.multi_reduction <maximumf>, %119, %cst_58 [1] : vector<16x16xf32> to vector<16xf32>
    %121 = vector.shape_cast %120 : vector<16xf32> to vector<16x1xf32>
    %122 = vector.broadcast %121 : vector<16x1xf32> to vector<16x16xf32>
    %123 = arith.subf %119, %122 : vector<16x16xf32>
    %124 = math.exp %123 : vector<16x16xf32>
    %cst_59 = arith.constant dense<0.000000e+00> : vector<16xf32>
    %125 = vector.multi_reduction <add>, %124, %cst_59 [1] : vector<16x16xf32> to vector<16xf32>
    %126 = vector.shape_cast %125 : vector<16xf32> to vector<16x1xf32>
    %127 = tpu.reciprocal %126 {approx = true} : vector<16x1xf32> -> vector<16x1xf32>
    %128 = vector.broadcast %127 : vector<16x1xf32> to vector<16x16xf32>
    %129 = arith.mulf %124, %128 : vector<16x16xf32>
    %130 = vector.extract_strided_slice %18 {offsets = [16, 0], sizes = [16, 16], strides = [1, 1]} : vector<32x16xf32> to vector<16x16xf32>
    %cst_60 = arith.constant dense<0.000000e+00> : vector<16x16xf32>
    %131 = tpu.matmul %36, %130, %cst_60 {dimension_numbers = #tpu.dot_dimension_numbers<[1], [0], [0], [1], [0, 0, 1, 1], [], []>} : vector<16x16xf32>, vector<16x16xf32>, vector<16x16xf32> -> vector<16x16xf32>
    %132 = arith.addf %131, %38 : vector<16x16xf32>
    %cst_61 = arith.constant dense<0xFF800000> : vector<16xf32>
    %133 = vector.multi_reduction <maximumf>, %132, %cst_61 [1] : vector<16x16xf32> to vector<16xf32>
    %134 = vector.shape_cast %133 : vector<16xf32> to vector<16x1xf32>
    %135 = vector.broadcast %134 : vector<16x1xf32> to vector<16x16xf32>
    %136 = arith.subf %132, %135 : vector<16x16xf32>
    %137 = math.exp %136 : vector<16x16xf32>
    %cst_62 = arith.constant dense<0.000000e+00> : vector<16xf32>
    %138 = vector.multi_reduction <add>, %137, %cst_62 [1] : vector<16x16xf32> to vector<16xf32>
    %139 = vector.shape_cast %138 : vector<16xf32> to vector<16x1xf32>
    %140 = tpu.reciprocal %139 {approx = true} : vector<16x1xf32> -> vector<16x1xf32>
    %141 = vector.broadcast %140 : vector<16x1xf32> to vector<16x16xf32>
    %142 = arith.mulf %137, %141 : vector<16x16xf32>
    %143 = vector.extract_strided_slice %2 {offsets = [16, 0], sizes = [16, 2], strides = [1, 1]} : vector<32x2xf32> to vector<16x2xf32>
    %cst_63 = arith.constant dense<0.000000e+00> : vector<16x2xf32>
    %144 = tpu.matmul %129, %143, %cst_63 {dimension_numbers = #tpu.dot_dimension_numbers<[1], [0], [0], [1], [0, 0, 1, 1], [], []>} : vector<16x16xf32>, vector<16x2xf32>, vector<16x2xf32> -> vector<16x2xf32>
    %145 = vector.extract_strided_slice %2 {offsets = [16, 0], sizes = [16, 2], strides = [1, 1]} : vector<32x2xf32> to vector<16x2xf32>
    %cst_64 = arith.constant dense<0.000000e+00> : vector<16x2xf32>
    %146 = tpu.matmul %142, %145, %cst_64 {dimension_numbers = #tpu.dot_dimension_numbers<[1], [0], [0], [1], [0, 0, 1, 1], [], []>} : vector<16x16xf32>, vector<16x2xf32>, vector<16x2xf32> -> vector<16x2xf32>
    %c0_i32_65 = arith.constant 0 : i32
    %147 = vector.broadcast %c0_i32_65 : i32 to vector<16x2xi32>
    %148 = arith.cmpi eq, %46, %147 : vector<16x2xi32>
    %149 = arith.select %148, %144, %146 : vector<16x2xi1>, vector<16x2xf32>
    %150 = vector.extract_strided_slice %27 {offsets = [16, 0], sizes = [16, 2], strides = [1, 1]} : vector<32x2xf32> to vector<16x2xf32>
    %151 = arith.addf %149, %150 : vector<16x2xf32>
    %152 = vector.extract_strided_slice %31 {offsets = [16, 0], sizes = [16, 4], strides = [1, 1]} : vector<32x4xf32> to vector<16x4xf32>
    %cst_66 = arith.constant dense<0.000000e+00> : vector<16x4xf32>
    %153 = tpu.matmul %39, %152, %cst_66 {dimension_numbers = #tpu.dot_dimension_numbers<[1], [0], [0], [1], [0, 0, 1, 1], [], []>} : vector<16x16xf32>, vector<16x4xf32>, vector<16x4xf32> -> vector<16x4xf32>
    %154 = vector.broadcast %43 : vector<1x4xf32> to vector<16x4xf32>
    %155 = arith.addf %153, %154 : vector<16x4xf32>
    %156 = arith.negf %155 : vector<16x4xf32>
    %157 = math.exp %156 : vector<16x4xf32>
    %cst_67 = arith.constant 1.000000e+00 : f32
    %158 = vector.broadcast %cst_67 : f32 to vector<16x4xf32>
    %159 = arith.addf %158, %157 : vector<16x4xf32>
    %160 = arith.divf %158, %159 : vector<16x4xf32>
    %161 = vector.extract_strided_slice %34 {offsets = [16, 0], sizes = [16, 4], strides = [1, 1]} : vector<32x4xf32> to vector<16x4xf32>
    %cst_68 = arith.constant dense<0.000000e+00> : vector<16x4xf32>
    %162 = tpu.matmul %40, %161, %cst_68 {dimension_numbers = #tpu.dot_dimension_numbers<[1], [0], [0], [1], [0, 0, 1, 1], [], []>} : vector<16x16xf32>, vector<16x4xf32>, vector<16x4xf32> -> vector<16x4xf32>
    %163 = vector.broadcast %44 : vector<1x4xf32> to vector<16x4xf32>
    %164 = arith.addf %162, %163 : vector<16x4xf32>
    %165 = arith.negf %164 : vector<16x4xf32>
    %166 = math.exp %165 : vector<16x4xf32>
    %cst_69 = arith.constant 1.000000e+00 : f32
    %167 = vector.broadcast %cst_69 : f32 to vector<16x4xf32>
    %168 = arith.addf %167, %166 : vector<16x4xf32>
    %169 = arith.divf %167, %168 : vector<16x4xf32>
    %170 = arith.mulf %160, %116 : vector<16x4xf32>
    %171 = vector.extract_strided_slice %28 {offsets = [16, 0], sizes = [16, 4], strides = [1, 1]} : vector<32x4xf32> to vector<16x4xf32>
    %cst_70 = arith.constant dense<0.000000e+00> : vector<16x4xf32>
    %172 = tpu.matmul %170, %42, %cst_70 {dimension_numbers = #tpu.dot_dimension_numbers<[1], [0], [0], [1], [0, 0, 1, 1], [], []>} : vector<16x4xf32>, vector<4x4xf32>, vector<16x4xf32> -> vector<16x4xf32>
    %173 = arith.addf %171, %172 : vector<16x4xf32>
    %cst_71 = arith.constant dense<0.000000e+00> : vector<16x4xf32>
    %174 = tpu.matmul %41, %173, %cst_71 {dimension_numbers = #tpu.dot_dimension_numbers<[1], [0], [0], [1], [0, 0, 1, 1], [], []>} : vector<16x16xf32>, vector<16x4xf32>, vector<16x4xf32> -> vector<16x4xf32>
    %175 = vector.broadcast %45 : vector<1x4xf32> to vector<16x4xf32>
    %176 = arith.addf %174, %175 : vector<16x4xf32>
    %177 = math.tanh %176 : vector<16x4xf32>
    %178 = arith.mulf %169, %116 : vector<16x4xf32>
    %cst_72 = arith.constant 1.000000e+00 : f32
    %179 = vector.broadcast %cst_72 : f32 to vector<16x4xf32>
    %180 = arith.subf %179, %169 : vector<16x4xf32>
    %181 = arith.mulf %180, %177 : vector<16x4xf32>
    %182 = arith.addf %178, %181 : vector<16x4xf32>
    %c16 = arith.constant 16 : index
    %c0_73 = arith.constant 0 : index
    %183 = vector.load %arg18[%c16, %c0_73] : memref<32x2xf32, #tpu.memory_space<vmem>>, vector<16x2xf32>
    tpu.vector_store %arg18[%c16, %c0_73], %151 {strides = array<i32>} : memref<32x2xf32, #tpu.memory_space<vmem>>, vector<16x2xf32>,
    %c16_74 = arith.constant 16 : index
    %c0_75 = arith.constant 0 : index
    %184 = vector.load %arg19[%c16_74, %c0_75] : memref<32x4xf32, #tpu.memory_space<vmem>>, vector<16x4xf32>
    tpu.vector_store %arg19[%c16_74, %c0_75], %182 {strides = array<i32>} : memref<32x4xf32, #tpu.memory_space<vmem>>, vector<16x4xf32>,
    return
  }
}

</mosaic_0001>

<llo_original>
// kernel: forward.1
$region0: #{forward.1}
  #allocation0 [shape = 'u32[]', space=smem, size = 0x4, offset = 0x4, fixed_abs, tag = 'smem constant byte address 0x4 - core index']
  #allocation1 [shape = 'u32[144,128]{1,0:T(1,128)}', space=vmem, size = 0x12000, scoped, tag = 'internal scratch']
  %s0 = inlined_call_operand.vmem [shape: f32[32,3], index: 0, kind: input, shape index: {}]
  %s1 = inlined_call_operand.vmem [shape: f32[32,4], index: 1, kind: input, shape index: {}]
  %s2 = inlined_call_operand.vmem [shape: f32[16,16], index: 2, kind: input, shape index: {}]
  %s3 = inlined_call_operand.vmem [shape: f32[16,16], index: 3, kind: input, shape index: {}]
  %s4 = inlined_call_operand.vmem [shape: f32[16,16], index: 4, kind: input, shape index: {}]
  %s5 = inlined_call_operand.vmem [shape: f32[16,16], index: 5, kind: input, shape index: {}]
  %s6 = inlined_call_operand.vmem [shape: f32[3,12], index: 6, kind: input, shape index: {}]
  %s7 = inlined_call_operand.vmem [shape: f32[1,4], index: 7, kind: input, shape index: {}]
  %s8 = inlined_call_operand.vmem [shape: f32[4,38], index: 8, kind: input, shape index: {}]
  %s9 = inlined_call_operand.vmem [shape: f32[4,42], index: 9, kind: input, shape index: {}]
  %s10 = inlined_call_operand.hbm [shape: f32[1,2], index: 10, kind: input, shape index: {}]
  %s11 = inlined_call_operand.vmem [shape: f32[16,16], index: 11, kind: input, shape index: {}]
  %s12 = inlined_call_operand.hbm [shape: f32[1,4], index: 12, kind: input, shape index: {}]
  %s13 = inlined_call_operand.vmem [shape: f32[16,16], index: 13, kind: input, shape index: {}]
  %s14 = inlined_call_operand.hbm [shape: f32[1,4], index: 14, kind: input, shape index: {}]
  %s15 = inlined_call_operand.hbm [shape: f32[16,16], index: 15, kind: input, shape index: {}]
  %s16 = inlined_call_operand.vmem [shape: f32[4,4], index: 16, kind: input, shape index: {}]
  %s17 = inlined_call_operand.hbm [shape: f32[1,4], index: 17, kind: input, shape index: {}]
  %s18 = inlined_call_operand.vmem [shape: f32[32,2], index: 18, kind: output, shape index: {0}]
  %s19 = inlined_call_operand.vmem [shape: f32[32,4], index: 19, kind: output, shape index: {1}]
  %20 = xla_tuple %s18, %s19
  %s21 = sld [smem:[#allocation0]]
  $region110: #{forward.1} parent=0
    _
  %s23 = ssub.s32 1, %s21
  %s24 = scalar_select 0, %s23, %s21
  $region1: #{forward.1} parent=0
    #allocation2 [shape = 'u8[512]{0}', space=vmem, size = 0x400, scoped, tag = 'input window, operand 10, single buffered']
    #allocation3 [shape = 's32[1]{0}', space=sflag, size = 0x4, scoped, tag = 'scoped memory for forward.1']
    #allocation4 [shape = 'u8[512]{0}', space=vmem, size = 0x400, scoped, tag = 'input window, operand 12, single buffered']
    #allocation5 [shape = 's32[1]{0}', space=sflag, size = 0x4, scoped, tag = 'scoped memory for forward.1']
    #allocation6 [shape = 'u8[512]{0}', space=vmem, size = 0x400, scoped, tag = 'input window, operand 14, single buffered']
    #allocation7 [shape = 'u8[8192]{0}', space=vmem, size = 0x2000, scoped, tag = 'input window, operand 15, single buffered']
    #allocation8 [shape = 's32[1]{0}', space=sflag, size = 0x4, scoped, tag = 'scoped memory for forward.1']
    #allocation9 [shape = 'u8[512]{0}', space=vmem, size = 0x400, scoped, tag = 'input window, operand 17, single buffered']
    %25 = vsyncpa [#allocation3], 0
    %26 = vsyncpa [#allocation5], 0
    %27 = vsyncpa [#allocation8], 0
    // Predicated region
    $region2: #{forward.1} parent=1 // pred_check
      _
    $region3: #{forward.1} parent=1 // pred_check_branch
      %29 = sbr.rel (0) target = $region5
    $region4: #{forward.1} parent=1 // pred_region
      _
    $region5: #{forward.1} parent=1 // pred_fallthru
      _
    // Predicated region
    $region6: #{forward.1} parent=1 // pred_check
      _
    $region7: #{forward.1} parent=1 // pred_check_branch
      %31 = sbr.rel (0) target = $region9
    $region8: #{forward.1} parent=1 // pred_region
      _
    $region9: #{forward.1} parent=1 // pred_fallthru
      _
    // Predicated region
    $region10: #{forward.1} parent=1 // pred_check
      _
    $region11: #{forward.1} parent=1 // pred_check_branch
      %33 = sbr.rel (0) target = $region13
    $region12: #{forward.1} parent=1 // pred_region
      _
    $region13: #{forward.1} parent=1 // pred_fallthru
      _
    // Predicated region
    $region14: #{forward.1} parent=1 // pred_check
      _
    $region15: #{forward.1} parent=1 // pred_check_branch
      %35 = sbr.rel (0) target = $region17
    $region16: #{forward.1} parent=1 // pred_region
      _
    $region17: #{forward.1} parent=1 // pred_fallthru
      _
    // Predicated region
    $region18: #{forward.1} parent=1 // pred_check
      _
    $region19: #{forward.1} parent=1 // pred_check_branch
      %37 = sbr.rel (0) target = $region21
    $region20: #{forward.1} parent=1 // pred_region
      _
    $region21: #{forward.1} parent=1 // pred_fallthru
      _
    // Predicated region
    $region22: #{forward.1} parent=1 // pred_check
      _
    $region23: #{forward.1} parent=1 // pred_check_branch
      %39 = sbr.rel (0) target = $region25
    $region24: #{forward.1} parent=1 // pred_region
      _
    $region25: #{forward.1} parent=1 // pred_fallthru
      _
    // Predicated region
    $region26: #{forward.1} parent=1 // pred_check
      _
    $region27: #{forward.1} parent=1 // pred_check_branch
      %41 = sbr.rel (0) target = $region29
    $region28: #{forward.1} parent=1 // pred_region
      _
    $region29: #{forward.1} parent=1 // pred_fallthru
      _
    // Predicated region
    $region30: #{forward.1} parent=1 // pred_check
      _
    $region31: #{forward.1} parent=1 // pred_check_branch
      %43 = sbr.rel (0) target = $region33
    $region32: #{forward.1} parent=1 // pred_region
      _
    $region33: #{forward.1} parent=1 // pred_fallthru
      _
    // Predicated region
    $region34: #{forward.1} parent=1 // pred_check
      _
    $region35: #{forward.1} parent=1 // pred_check_branch
      %45 = sbr.rel (0) target = $region37
    $region36: #{forward.1} parent=1 // pred_region
      _
    $region37: #{forward.1} parent=1 // pred_fallthru
      _
    // Predicated region
    $region38: #{forward.1} parent=1 // pred_check
      _
    $region39: #{forward.1} parent=1 // pred_check_branch
      %47 = sbr.rel (0) target = $region41
    $region40: #{forward.1} parent=1 // pred_region
      _
    $region41: #{forward.1} parent=1 // pred_fallthru
      _
    // Predicated region
    $region42: #{forward.1} parent=1 // pred_check
      _
    $region43: #{forward.1} parent=1 // pred_check_branch
      %49 = sbr.rel (0) target = $region45
    $region44: #{forward.1} parent=1 // pred_region
      %s51 = ssub.s32 16, 16
      %52 = vsyncadd [#allocation3], %s51
      %s54 = sshll.u32 [#allocation2], 4
      %s55 = int_to_ptr.vmem [resolvable:$true] %s54
      %57 = dma.hbm_to_vmem [thread:$0]  %s10, 16, %s55, [#allocation3]
    $region45: #{forward.1} parent=1 // pred_fallthru
      _
    // Predicated region
    $region46: #{forward.1} parent=1 // pred_check
      _
    $region47: #{forward.1} parent=1 // pred_check_branch
      %59 = sbr.rel (0) target = $region49
    $region48: #{forward.1} parent=1 // pred_region
      _
    $region49: #{forward.1} parent=1 // pred_fallthru
      _
    // Predicated region
    $region50: #{forward.1} parent=1 // pred_check
      _
    $region51: #{forward.1} parent=1 // pred_check_branch
      %61 = sbr.rel (0) target = $region53
    $region52: #{forward.1} parent=1 // pred_region
      %s63 = ssub.s32 16, 16
      %64 = vsyncadd [#allocation5], %s63
      %s66 = sshll.u32 [#allocation4], 4
      %s67 = int_to_ptr.vmem [resolvable:$true] %s66
      %69 = dma.hbm_to_vmem [thread:$0]  %s12, 16, %s67, [#allocation5]
    $region53: #{forward.1} parent=1 // pred_fallthru
      _
    // Predicated region
    $region54: #{forward.1} parent=1 // pred_check
      _
    $region55: #{forward.1} parent=1 // pred_check_branch
      %71 = sbr.rel (0) target = $region57
    $region56: #{forward.1} parent=1 // pred_region
      _
    $region57: #{forward.1} parent=1 // pred_fallthru
      _
    // Predicated region
    $region58: #{forward.1} parent=1 // pred_check
      _
    $region59: #{forward.1} parent=1 // pred_check_branch
      %73 = sbr.rel (0) target = $region61
    $region60: #{forward.1} parent=1 // pred_region
      %s75 = ssub.s32 16, 16
      %76 = vsyncadd [#allocation5], %s75
      %s78 = sshll.u32 [#allocation6], 4
      %s79 = int_to_ptr.vmem [resolvable:$true] %s78
      %81 = dma.hbm_to_vmem [thread:$0]  %s14, 16, %s79, [#allocation5]
    $region61: #{forward.1} parent=1 // pred_fallthru
      _
    // Predicated region
    $region62: #{forward.1} parent=1 // pred_check
      _
    $region63: #{forward.1} parent=1 // pred_check_branch
      %83 = sbr.rel (0) target = $region65
    $region64: #{forward.1} parent=1 // pred_region
      %s85 = ssub.s32 256, 256
      %86 = vsyncadd [#allocation8], %s85
      %s87 = sshll.u32 [#allocation7], 4
      %s88 = int_to_ptr.vmem [resolvable:$true] %s87
      %93 = dma.hbm_to_vmem [thread:$0]  %s15, 256, %s88, [#allocation8], 128, 128, 8
    $region65: #{forward.1} parent=1 // pred_fallthru
      _
    // Predicated region
    $region66: #{forward.1} parent=1 // pred_check
      _
    $region67: #{forward.1} parent=1 // pred_check_branch
      %95 = sbr.rel (0) target = $region69
    $region68: #{forward.1} parent=1 // pred_region
      _
    $region69: #{forward.1} parent=1 // pred_fallthru
      _
    // Predicated region
    $region70: #{forward.1} parent=1 // pred_check
      _
    $region71: #{forward.1} parent=1 // pred_check_branch
      %97 = sbr.rel (0) target = $region73
    $region72: #{forward.1} parent=1 // pred_region
      %s99 = ssub.s32 16, 16
      %100 = vsyncadd [#allocation8], %s99
      %s102 = sshll.u32 [#allocation9], 4
      %s103 = int_to_ptr.vmem [resolvable:$true] %s102
      %105 = dma.hbm_to_vmem [thread:$0]  %s17, 16, %s103, [#allocation8]
    $region73: #{forward.1} parent=1 // pred_fallthru
      _
    // Predicated region
    $region74: #{forward.1} parent=1 // pred_check
      _
    $region75: #{forward.1} parent=1 // pred_check_branch
      %107 = sbr.rel (0) target = $region77
    $region76: #{forward.1} parent=1 // pred_region
      %108 = dma.done [#allocation3], 16
    $region77: #{forward.1} parent=1 // pred_fallthru
      _
    // Predicated region
    $region78: #{forward.1} parent=1 // pred_check
      _
    $region79: #{forward.1} parent=1 // pred_check_branch
      %110 = sbr.rel (0) target = $region81
    $region80: #{forward.1} parent=1 // pred_region
      %111 = dma.done [#allocation5], 16
    $region81: #{forward.1} parent=1 // pred_fallthru
      _
    // Predicated region
    $region82: #{forward.1} parent=1 // pred_check
      _
    $region83: #{forward.1} parent=1 // pred_check_branch
      %113 = sbr.rel (0) target = $region85
    $region84: #{forward.1} parent=1 // pred_region
      %114 = dma.done [#allocation5], 16
    $region85: #{forward.1} parent=1 // pred_fallthru
      _
    // Predicated region
    $region86: #{forward.1} parent=1 // pred_check
      _
    $region87: #{forward.1} parent=1 // pred_check_branch
      %116 = sbr.rel (0) target = $region89
    $region88: #{forward.1} parent=1 // pred_region
      %117 = dma.done [#allocation8], 256
    $region89: #{forward.1} parent=1 // pred_fallthru
      _
    // Predicated region
    $region90: #{forward.1} parent=1 // pred_check
      _
    $region91: #{forward.1} parent=1 // pred_check_branch
      %119 = sbr.rel (0) target = $region93
    $region92: #{forward.1} parent=1 // pred_region
      %120 = dma.done [#allocation8], 16
    $region93: #{forward.1} parent=1 // pred_fallthru
      _
    %v121 = vld [vmem:[%s0] sm:$0xff]
    %v122 = vld [vmem:[%s0 + $0x8] sm:$0xff]
    %v123 = vld [vmem:[%s0 + $0x10] sm:$0xff]
    %v124 = vld [vmem:[%s0 + $0x18] sm:$0xff]
    %v125 = vld [vmem:[%s1] sm:$0xff]
    %v126 = vld [vmem:[%s1 + $0x8] sm:$0xff]
    %v127 = vld [vmem:[%s1 + $0x10] sm:$0xff]
    %v128 = vld [vmem:[%s1 + $0x18] sm:$0xff]
    %v129 = vld [vmem:[%s6] sm:$0x7]
    %vm130 = vcmask 23552
    %v132 = vsel %vm130, %v121, 0
    %v135 = vsel %vm130, %v122, 0
    %v138 = vsel %vm130, %v123, 0
    %v141 = vsel %vm130, %v124, 0
    %vm143 = vcmask 1042432
    %v145 = vsel %vm143, %v129, 0
    %147 = vmatprep.subr.mxu0 0.0
    %148 = vmatpush1.msra.mxu0 %v145
    %149 = vmatprep.subr.mxu0 0.0
    %150 = vmatpush1.msra.mxu0 0.0
    %151 = vmatprep.subr.mxu0 0.0
    %152 = vmatpush1.msra.mxu0 0.0
    %153 = vmatprep.subr.mxu0 0.0
    %154 = vmatpush1.msra.mxu0 0.0
    %155 = vmatprep.subr.mxu0 0.0
    %156 = vmatpush1.msra.mxu0 0.0
    %157 = vmatprep.subr.mxu0 0.0
    %158 = vmatpush1.msra.mxu0 0.0
    %159 = vmatprep.subr.mxu0 0.0
    %160 = vmatpush1.msra.mxu0 0.0
    %161 = vmatprep.subr.mxu0 0.0
    %162 = vmatpush1.msra.mxu0 0.0
    %163 = vmatprep.subr.mxu0 0.0
    %164 = vmatpush1.msra.mxu0 0.0
    %165 = vmatprep.subr.mxu0 0.0
    %166 = vmatpush1.msra.mxu0 0.0
    %167 = vmatprep.subr.mxu0 0.0
    %168 = vmatpush1.msra.mxu0 0.0
    %169 = vmatprep.subr.mxu0 0.0
    %170 = vmatpush1.msra.mxu0 0.0
    %171 = vmatprep.subr.mxu0 0.0
    %172 = vmatpush1.msra.mxu0 0.0
    %173 = vmatprep.subr.mxu0 0.0
    %174 = vmatpush1.msra.mxu0 0.0
    %175 = vmatprep.subr.mxu0 0.0
    %176 = vmatpush1.msra.mxu0 0.0
    %177 = vmatprep.subr.mxu0 0.0
    %178 = vmatpush1.msra.mxu0 0.0
    %179 = vmatprep.subr.mxu0 0.0
    %180 = vmatpush1.msra.mxu0 0.0
    %181 = vmatprep.subr.mxu0 0.0
    %182 = vmatpush1.msra.mxu0 0.0
    %183 = vmatprep.subr.mxu0 0.0
    %184 = vmatpush1.msra.mxu0 0.0
    %185 = vmatprep.subr.mxu0 0.0
    %186 = vmatpush1.msra.mxu0 0.0
    %187 = vmatprep.subr.mxu0 0.0
    %188 = vmatpush1.msra.mxu0 0.0
    %189 = vmatprep.subr.mxu0 0.0
    %190 = vmatpush1.msra.mxu0 0.0
    %191 = vmatprep.subr.mxu0 0.0
    %192 = vmatpush1.msra.mxu0 0.0
    %193 = vmatprep.subr.mxu0 0.0
    %194 = vmatpush1.msra.mxu0 0.0
    %195 = vmatprep.subr.mxu0 0.0
    %196 = vmatpush1.msra.mxu0 0.0
    %197 = vmatprep.subr.mxu0 0.0
    %198 = vmatpush1.msra.mxu0 0.0
    %199 = vmatprep.subr.mxu0 0.0
    %200 = vmatpush1.msra.mxu0 0.0
    %201 = vmatprep.subr.mxu0 0.0
    %202 = vmatpush1.msra.mxu0 0.0
    %203 = vmatprep.subr.mxu0 0.0
    %204 = vmatpush1.msra.mxu0 0.0
    %205 = vmatprep.subr.mxu0 0.0
    %206 = vmatpush1.msra.mxu0 0.0
    %207 = vmatprep.subr.mxu0 0.0
    %208 = vmatpush1.msra.mxu0 0.0
    %209 = vmatprep.subr.mxu0 0.0
    %210 = vmatpush1.msra.mxu0 0.0
    %211 = vmatprep.mubr.f32.mxu0 0.0
    %212 = vmatmul.mubr.f32.gmra.mrb[0].mxu0 %v132
    %v213 = vpop.f32.mrb[0].mxu0
    %v214 = vadd.f32 0.0, %v213
    %v215 = vpop.f32.mrb[0].mxu0
    %216 = vmatprep.mubr.f32.mxu0 0.0
    %217 = vmatmul.mubr.f32.gmra.mrb[0].mxu0 %v135
    %v218 = vpop.f32.mrb[0].mxu0
    %v219 = vadd.f32 0.0, %v218
    %v220 = vpop.f32.mrb[0].mxu0
    %221 = vmatprep.mubr.f32.mxu0 0.0
    %222 = vmatmul.mubr.f32.gmra.mrb[0].mxu0 %v138
    %v223 = vpop.f32.mrb[0].mxu0
    %v224 = vadd.f32 0.0, %v223
    %v225 = vpop.f32.mrb[0].mxu0
    %226 = vmatprep.mubr.f32.mxu0 0.0
    %227 = vmatmul.mubr.f32.gmra.mrb[0].mxu0 %v141
    %v228 = vpop.f32.mrb[0].mxu0
    %v229 = vadd.f32 0.0, %v228
    %v230 = vpop.f32.mrb[0].mxu0
    %231 = vdwg.mxu0
    %v232 = vld [vmem:[%s9] sm:$0xf]
    %vm233 = vcmask 31744
    %v235 = vsel %vm233, %v125, 0
    %v238 = vsel %vm233, %v126, 0
    %v241 = vsel %vm233, %v127, 0
    %v244 = vsel %vm233, %v128, 0
    %vm246 = vcmask 1043456
    %v248 = vsel %vm246, %v232, 0
    %250 = vmatprep.subr.mxu0 0.0
    %251 = vmatpush1.msra.mxu0 %v248
    %252 = vmatprep.subr.mxu0 0.0
    %253 = vmatpush1.msra.mxu0 0.0
    %254 = vmatprep.subr.mxu0 0.0
    %255 = vmatpush1.msra.mxu0 0.0
    %256 = vmatprep.subr.mxu0 0.0
    %257 = vmatpush1.msra.mxu0 0.0
    %258 = vmatprep.subr.mxu0 0.0
    %259 = vmatpush1.msra.mxu0 0.0
    %260 = vmatprep.subr.mxu0 0.0
    %261 = vmatpush1.msra.mxu0 0.0
    %262 = vmatprep.subr.mxu0 0.0
    %263 = vmatpush1.msra.mxu0 0.0
    %264 = vmatprep.subr.mxu0 0.0
    %265 = vmatpush1.msra.mxu0 0.0
    %266 = vmatprep.subr.mxu0 0.0
    %267 = vmatpush1.msra.mxu0 0.0
    %268 = vmatprep.subr.mxu0 0.0
    %269 = vmatpush1.msra.mxu0 0.0
    %270 = vmatprep.subr.mxu0 0.0
    %271 = vmatpush1.msra.mxu0 0.0
    %272 = vmatprep.subr.mxu0 0.0
    %273 = vmatpush1.msra.mxu0 0.0
    %274 = vmatprep.subr.mxu0 0.0
    %275 = vmatpush1.msra.mxu0 0.0
    %276 = vmatprep.subr.mxu0 0.0
    %277 = vmatpush1.msra.mxu0 0.0
    %278 = vmatprep.subr.mxu0 0.0
    %279 = vmatpush1.msra.mxu0 0.0
    %280 = vmatprep.subr.mxu0 0.0
    %281 = vmatpush1.msra.mxu0 0.0
    %282 = vmatprep.subr.mxu0 0.0
    %283 = vmatpush1.msra.mxu0 0.0
    %284 = vmatprep.subr.mxu0 0.0
    %285 = vmatpush1.msra.mxu0 0.0
    %286 = vmatprep.subr.mxu0 0.0
    %287 = vmatpush1.msra.mxu0 0.0
    %288 = vmatprep.subr.mxu0 0.0
    %289 = vmatpush1.msra.mxu0 0.0
    %290 = vmatprep.subr.mxu0 0.0
    %291 = vmatpush1.msra.mxu0 0.0
    %292 = vmatprep.subr.mxu0 0.0
    %293 = vmatpush1.msra.mxu0 0.0
    %294 = vmatprep.subr.mxu0 0.0
    %295 = vmatpush1.msra.mxu0 0.0
    %296 = vmatprep.subr.mxu0 0.0
    %297 = vmatpush1.msra.mxu0 0.0
    %298 = vmatprep.subr.mxu0 0.0
    %299 = vmatpush1.msra.mxu0 0.0
    %300 = vmatprep.subr.mxu0 0.0
    %301 = vmatpush1.msra.mxu0 0.0
    %302 = vmatprep.subr.mxu0 0.0
    %303 = vmatpush1.msra.mxu0 0.0
    %304 = vmatprep.subr.mxu0 0.0
    %305 = vmatpush1.msra.mxu0 0.0
    %306 = vmatprep.subr.mxu0 0.0
    %307 = vmatpush1.msra.mxu0 0.0
    %308 = vmatprep.subr.mxu0 0.0
    %309 = vmatpush1.msra.mxu0 0.0
    %310 = vmatprep.subr.mxu0 0.0
    %311 = vmatpush1.msra.mxu0 0.0
    %312 = vmatprep.subr.mxu0 0.0
    %313 = vmatpush1.msra.mxu0 0.0
    %314 = vmatprep.mubr.f32.mxu0 0.0
    %315 = vmatmul.mubr.f32.gmra.mrb[0].mxu0 %v235
    %v316 = vpop.f32.mrb[0].mxu0
    %v317 = vadd.f32 0.0, %v316
    %v318 = vpop.f32.mrb[0].mxu0
    %319 = vmatprep.mubr.f32.mxu0 0.0
    %320 = vmatmul.mubr.f32.gmra.mrb[0].mxu0 %v238
    %v321 = vpop.f32.mrb[0].mxu0
    %v322 = vadd.f32 0.0, %v321
    %v323 = vpop.f32.mrb[0].mxu0
    %324 = vmatprep.mubr.f32.mxu0 0.0
    %325 = vmatmul.mubr.f32.gmra.mrb[0].mxu0 %v241
    %v326 = vpop.f32.mrb[0].mxu0
    %v327 = vadd.f32 0.0, %v326
    %v328 = vpop.f32.mrb[0].mxu0
    %329 = vmatprep.mubr.f32.mxu0 0.0
    %330 = vmatmul.mubr.f32.gmra.mrb[0].mxu0 %v244
    %v331 = vpop.f32.mrb[0].mxu0
    %v332 = vadd.f32 0.0, %v331
    %v333 = vpop.f32.mrb[0].mxu0
    %334 = vdwg.mxu0
    %v335 = vld [vmem:[%s7] sm:$0x1]
    %v337 = vlaneseq
    %v338 = vshrl.u32 %v337, 7
    %v339 = vsub.s32 0, %v338
    %v340 = vrot.slane %v335, %v339
    %v342 = vadd.f32 %v214, %v340
    %v343 = vadd.f32 %v219, %v340
    %v344 = vadd.f32 %v224, %v340
    %v345 = vadd.f32 %v229, %v340
    %v346 = vld [vmem:[%s8] sm:$0xf]
    %v348 = vsel %vm233, %v342, 0
    %v351 = vsel %vm233, %v343, 0
    %v354 = vsel %vm233, %v344, 0
    %v357 = vsel %vm233, %v345, 0
    %v360 = vsel %vm246, %v346, 0
    %362 = vmatprep.subr.mxu0 0.0
    %363 = vmatpush1.msra.mxu0 %v360
    %364 = vmatprep.subr.mxu0 0.0
    %365 = vmatpush1.msra.mxu0 0.0
    %366 = vmatprep.subr.mxu0 0.0
    %367 = vmatpush1.msra.mxu0 0.0
    %368 = vmatprep.subr.mxu0 0.0
    %369 = vmatpush1.msra.mxu0 0.0
    %370 = vmatprep.subr.mxu0 0.0
    %371 = vmatpush1.msra.mxu0 0.0
    %372 = vmatprep.subr.mxu0 0.0
    %373 = vmatpush1.msra.mxu0 0.0
    %374 = vmatprep.subr.mxu0 0.0
    %375 = vmatpush1.msra.mxu0 0.0
    %376 = vmatprep.subr.mxu0 0.0
    %377 = vmatpush1.msra.mxu0 0.0
    %378 = vmatprep.subr.mxu0 0.0
    %379 = vmatpush1.msra.mxu0 0.0
    %380 = vmatprep.subr.mxu0 0.0
    %381 = vmatpush1.msra.mxu0 0.0
    %382 = vmatprep.subr.mxu0 0.0
    %383 = vmatpush1.msra.mxu0 0.0
    %384 = vmatprep.subr.mxu0 0.0
    %385 = vmatpush1.msra.mxu0 0.0
    %386 = vmatprep.subr.mxu0 0.0
    %387 = vmatpush1.msra.mxu0 0.0
    %388 = vmatprep.subr.mxu0 0.0
    %389 = vmatpush1.msra.mxu0 0.0
    %390 = vmatprep.subr.mxu0 0.0
    %391 = vmatpush1.msra.mxu0 0.0
    %392 = vmatprep.subr.mxu0 0.0
    %393 = vmatpush1.msra.mxu0 0.0
    %394 = vmatprep.subr.mxu0 0.0
    %395 = vmatpush1.msra.mxu0 0.0
    %396 = vmatprep.subr.mxu0 0.0
    %397 = vmatpush1.msra.mxu0 0.0
    %398 = vmatprep.subr.mxu0 0.0
    %399 = vmatpush1.msra.mxu0 0.0
    %400 = vmatprep.subr.mxu0 0.0
    %401 = vmatpush1.msra.mxu0 0.0
    %402 = vmatprep.subr.mxu0 0.0
    %403 = vmatpush1.msra.mxu0 0.0
    %404 = vmatprep.subr.mxu0 0.0
    %405 = vmatpush1.msra.mxu0 0.0
    %406 = vmatprep.subr.mxu0 0.0
    %407 = vmatpush1.msra.mxu0 0.0
    %408 = vmatprep.subr.mxu0 0.0
    %409 = vmatpush1.msra.mxu0 0.0
    %410 = vmatprep.subr.mxu0 0.0
    %411 = vmatpush1.msra.mxu0 0.0
    %412 = vmatprep.subr.mxu0 0.0
    %413 = vmatpush1.msra.mxu0 0.0
    %414 = vmatprep.subr.mxu0 0.0
    %415 = vmatpush1.msra.mxu0 0.0
    %416 = vmatprep.subr.mxu0 0.0
    %417 = vmatpush1.msra.mxu0 0.0
    %418 = vmatprep.subr.mxu0 0.0
    %419 = vmatpush1.msra.mxu0 0.0
    %420 = vmatprep.subr.mxu0 0.0
    %421 = vmatpush1.msra.mxu0 0.0
    %422 = vmatprep.subr.mxu0 0.0
    %423 = vmatpush1.msra.mxu0 0.0
    %424 = vmatprep.subr.mxu0 0.0
    %425 = vmatpush1.msra.mxu0 0.0
    %426 = vmatprep.mubr.f32.mxu0 0.0
    %427 = vmatmul.mubr.f32.gmra.mrb[0].mxu0 %v348
    %v428 = vpop.f32.mrb[0].mxu0
    %v429 = vadd.f32 0.0, %v428
    %v430 = vpop.f32.mrb[0].mxu0
    %431 = vmatprep.mubr.f32.mxu0 0.0
    %432 = vmatmul.mubr.f32.gmra.mrb[0].mxu0 %v351
    %v433 = vpop.f32.mrb[0].mxu0
    %v434 = vadd.f32 0.0, %v433
    %v435 = vpop.f32.mrb[0].mxu0
    %436 = vmatprep.mubr.f32.mxu0 0.0
    %437 = vmatmul.mubr.f32.gmra.mrb[0].mxu0 %v354
    %v438 = vpop.f32.mrb[0].mxu0
    %v439 = vadd.f32 0.0, %v438
    %v440 = vpop.f32.mrb[0].mxu0
    %441 = vmatprep.mubr.f32.mxu0 0.0
    %442 = vmatmul.mubr.f32.gmra.mrb[0].mxu0 %v357
    %v443 = vpop.f32.mrb[0].mxu0
    %v444 = vadd.f32 0.0, %v443
    %v445 = vpop.f32.mrb[0].mxu0
    %446 = vdwg.mxu0
    %v447 = vadd.f32 %v429, %v317
    %v448 = vadd.f32 %v434, %v322
    %v449 = vadd.f32 %v439, %v327
    %v450 = vadd.f32 %v444, %v332
    %v451 = vld [vmem:[#allocation2] sm:$0x1]
    %v453 = vlaneseq
    %v454 = vshrl.u32 %v453, 7
    %v455 = vsub.s32 0, %v454
    %v456 = vrot.slane %v451, %v455
    %457 = vrot.lane.b32.xlu0 %v456, 32
    %v458 = vpop.permute.xlu0 %457
    %v460 = vadd.f32 %v447, %v458
    %v461 = vadd.f32 %v448, %v458
    %v462 = vadd.f32 %v449, %v458
    %v463 = vadd.f32 %v450, %v458
    %v464 = vtanh.pop %v460
    %v465 = vtanh.pop %v461
    %v466 = vtanh.pop %v462
    %v467 = vtanh.pop %v463
    %v468 = vmul.f32 %v464, 0.5
    %v469 = vmul.f32 %v465, 0.5
    %v470 = vmul.f32 %v466, 0.5
    %v471 = vmul.f32 %v467, 0.5
    %476 = vrot.lane.b32.xlu0 %v317, 98
    %v477 = vpop.permute.xlu0 %476
    %478 = vrot.lane.b32.xlu0 %v322, 98
    %v479 = vpop.permute.xlu0 %478
    %480 = vrot.lane.b32.xlu0 %v327, 98
    %v481 = vpop.permute.xlu0 %480
    %482 = vrot.lane.b32.xlu0 %v332, 98
    %v483 = vpop.permute.xlu0 %482
    %v488 = vadd.f32 %v214, %v477
    %v489 = vadd.f32 %v219, %v479
    %v490 = vadd.f32 %v224, %v481
    %v491 = vadd.f32 %v229, %v483
    %v492 = vld [vmem:[%s2] sm:$0xff]
    %v493 = vld [vmem:[%s2 + $0x8] sm:$0xff]
    %v494 = vld [vmem:[%s3] sm:$0xff]
    %v495 = vld [vmem:[%s3 + $0x8] sm:$0xff]
    %v496 = vld [vmem:[%s4] sm:$0xff]
    %v497 = vld [vmem:[%s4 + $0x8] sm:$0xff]
    %v498 = vld [vmem:[%s5] sm:$0xff]
    %v499 = vld [vmem:[%s5 + $0x8] sm:$0xff]
    %v500 = vld [vmem:[%s11] sm:$0xff]
    %v501 = vld [vmem:[%s11 + $0x8] sm:$0xff]
    %v502 = vld [vmem:[%s13] sm:$0xff]
    %v503 = vld [vmem:[%s13 + $0x8] sm:$0xff]
    %v504 = vld [vmem:[#allocation7] sm:$0xff]
    %v505 = vld [vmem:[#allocation7 + $0x8] sm:$0xff]
    %v506 = vld [vmem:[%s16] sm:$0xf]
    %v507 = vld [vmem:[#allocation4] sm:$0x1]
    %v508 = vld [vmem:[#allocation6] sm:$0x1]
    %v509 = vld [vmem:[#allocation9] sm:$0x1]
    %v510 = vlaneseq
    %v511 = vand.u32 %v510, 127
    %vm512 = vcmask 130048
    %v514 = vsel %vm512, %v492, 0
    %v517 = vsel %vm512, %v493, 0
    %519 = vmatprep.subr.mxu0 0.0
    %520 = vmatpush1.msra.mxu0 %v447
    %521 = vmatprep.subr.mxu0 0.0
    %522 = vmatpush1.msra.mxu0 %v448
    %523 = vmatprep.subr.mxu0 0.0
    %524 = vmatpush1.msra.mxu0 0.0
    %525 = vmatprep.subr.mxu0 0.0
    %526 = vmatpush1.msra.mxu0 0.0
    %527 = vmatprep.subr.mxu0 0.0
    %528 = vmatpush1.msra.mxu0 0.0
    %529 = vmatprep.subr.mxu0 0.0
    %530 = vmatpush1.msra.mxu0 0.0
    %531 = vmatprep.subr.mxu0 0.0
    %532 = vmatpush1.msra.mxu0 0.0
    %533 = vmatprep.subr.mxu0 0.0
    %534 = vmatpush1.msra.mxu0 0.0
    %535 = vmatprep.subr.mxu0 0.0
    %536 = vmatpush1.msra.mxu0 0.0
    %537 = vmatprep.subr.mxu0 0.0
    %538 = vmatpush1.msra.mxu0 0.0
    %539 = vmatprep.subr.mxu0 0.0
    %540 = vmatpush1.msra.mxu0 0.0
    %541 = vmatprep.subr.mxu0 0.0
    %542 = vmatpush1.msra.mxu0 0.0
    %543 = vmatprep.subr.mxu0 0.0
    %544 = vmatpush1.msra.mxu0 0.0
    %545 = vmatprep.subr.mxu0 0.0
    %546 = vmatpush1.msra.mxu0 0.0
    %547 = vmatprep.subr.mxu0 0.0
    %548 = vmatpush1.msra.mxu0 0.0
    %549 = vmatprep.subr.mxu0 0.0
    %550 = vmatpush1.msra.mxu0 0.0
    %551 = vmatprep.subr.mxu0 0.0
    %552 = vmatpush1.msra.mxu0 0.0
    %553 = vmatprep.subr.mxu0 0.0
    %554 = vmatpush1.msra.mxu0 0.0
    %555 = vmatprep.subr.mxu0 0.0
    %556 = vmatpush1.msra.mxu0 0.0
    %557 = vmatprep.subr.mxu0 0.0
    %558 = vmatpush1.msra.mxu0 0.0
    %559 = vmatprep.subr.mxu0 0.0
    %560 = vmatpush1.msra.mxu0 0.0
    %561 = vmatprep.subr.mxu0 0.0
    %562 = vmatpush1.msra.mxu0 0.0
    %563 = vmatprep.subr.mxu0 0.0
    %564 = vmatpush1.msra.mxu0 0.0
    %565 = vmatprep.subr.mxu0 0.0
    %566 = vmatpush1.msra.mxu0 0.0
    %567 = vmatprep.subr.mxu0 0.0
    %568 = vmatpush1.msra.mxu0 0.0
    %569 = vmatprep.subr.mxu0 0.0
    %570 = vmatpush1.msra.mxu0 0.0
    %571 = vmatprep.subr.mxu0 0.0
    %572 = vmatpush1.msra.mxu0 0.0
    %573 = vmatprep.subr.mxu0 0.0
    %574 = vmatpush1.msra.mxu0 0.0
    %575 = vmatprep.subr.mxu0 0.0
    %576 = vmatpush1.msra.mxu0 0.0
    %577 = vmatprep.subr.mxu0 0.0
    %578 = vmatpush1.msra.mxu0 0.0
    %579 = vmatprep.subr.mxu0 0.0
    %580 = vmatpush1.msra.mxu0 0.0
    %581 = vmatprep.subr.mxu0 0.0
    %582 = vmatpush1.msra.mxu0 0.0
    %583 = vmatprep.mubr.f32.mxu0 0.0
    %584 = vmatmul.mubr.f32.gmra.mrb[0].mxu0 %v514
    %v585 = vpop.f32.mrb[0].mxu0
    %v586 = vadd.f32 %v496, %v585
    %v587 = vpop.f32.mrb[0].mxu0
    %588 = vmatprep.mubr.f32.mxu0 0.0
    %589 = vmatmul.mubr.f32.gmra.mrb[0].mxu0 %v517
    %v590 = vpop.f32.mrb[0].mxu0
    %v591 = vadd.f32 %v497, %v590
    %v592 = vpop.f32.mrb[0].mxu0
    %593 = vdwg.mxu0
    %v594 = vsel %vm512, %v586, -inf
    %595 = vmax.xlane.f32.xlu0 %v594
    %v596 = vpop.xlane.xlu0 %595
    %v597 = vsel %vm512, %v591, -inf
    %598 = vmax.xlane.f32.xlu0 %v597
    %v599 = vpop.xlane.xlu0 %598
    %v600 = vsub.f32 %v586, %v596
    %v601 = vsub.f32 %v591, %v599
    %v602 = vmul.f32 %v600, 1.442695
    %v603 = vpow.pop %v602
    %v604 = vmul.f32 %v601, 1.442695
    %v605 = vpow.pop %v604
    %v606 = vsel %vm512, %v603, 0.0
    %607 = vadd.xlane.f32.xlu0 %v606
    %v608 = vpop.xlane.xlu0 %607
    %v609 = vsel %vm512, %v605, 0.0
    %610 = vadd.xlane.f32.xlu0 %v609
    %v611 = vpop.xlane.xlu0 %610
    %v612 = vrcp.pop %v608
    %v613 = vrcp.pop %v611
    %v614 = vmul.f32 %v603, %v612
    %v615 = vmul.f32 %v605, %v613
    %618 = vrot.lane.b32.xlu0 %v447, 112
    %v619 = vpop.permute.xlu0 %618
    %620 = vrot.lane.b32.xlu0 %v448, 112
    %v621 = vpop.permute.xlu0 %620
    %v625 = vsel %vm512, %v494, 0
    %v628 = vsel %vm512, %v495, 0
    %630 = vmatprep.subr.mxu0 0.0
    %631 = vmatpush1.msra.mxu0 %v619
    %632 = vmatprep.subr.mxu0 0.0
    %633 = vmatpush1.msra.mxu0 %v621
    %634 = vmatprep.subr.mxu0 0.0
    %635 = vmatpush1.msra.mxu0 0.0
    %636 = vmatprep.subr.mxu0 0.0
    %637 = vmatpush1.msra.mxu0 0.0
    %638 = vmatprep.subr.mxu0 0.0
    %639 = vmatpush1.msra.mxu0 0.0
    %640 = vmatprep.subr.mxu0 0.0
    %641 = vmatpush1.msra.mxu0 0.0
    %642 = vmatprep.subr.mxu0 0.0
    %643 = vmatpush1.msra.mxu0 0.0
    %644 = vmatprep.subr.mxu0 0.0
    %645 = vmatpush1.msra.mxu0 0.0
    %646 = vmatprep.subr.mxu0 0.0
    %647 = vmatpush1.msra.mxu0 0.0
    %648 = vmatprep.subr.mxu0 0.0
    %649 = vmatpush1.msra.mxu0 0.0
    %650 = vmatprep.subr.mxu0 0.0
    %651 = vmatpush1.msra.mxu0 0.0
    %652 = vmatprep.subr.mxu0 0.0
    %653 = vmatpush1.msra.mxu0 0.0
    %654 = vmatprep.subr.mxu0 0.0
    %655 = vmatpush1.msra.mxu0 0.0
    %656 = vmatprep.subr.mxu0 0.0
    %657 = vmatpush1.msra.mxu0 0.0
    %658 = vmatprep.subr.mxu0 0.0
    %659 = vmatpush1.msra.mxu0 0.0
    %660 = vmatprep.subr.mxu0 0.0
    %661 = vmatpush1.msra.mxu0 0.0
    %662 = vmatprep.subr.mxu0 0.0
    %663 = vmatpush1.msra.mxu0 0.0
    %664 = vmatprep.subr.mxu0 0.0
    %665 = vmatpush1.msra.mxu0 0.0
    %666 = vmatprep.subr.mxu0 0.0
    %667 = vmatpush1.msra.mxu0 0.0
    %668 = vmatprep.subr.mxu0 0.0
    %669 = vmatpush1.msra.mxu0 0.0
    %670 = vmatprep.subr.mxu0 0.0
    %671 = vmatpush1.msra.mxu0 0.0
    %672 = vmatprep.subr.mxu0 0.0
    %673 = vmatpush1.msra.mxu0 0.0
    %674 = vmatprep.subr.mxu0 0.0
    %675 = vmatpush1.msra.mxu0 0.0
    %676 = vmatprep.subr.mxu0 0.0
    %677 = vmatpush1.msra.mxu0 0.0
    %678 = vmatprep.subr.mxu0 0.0
    %679 = vmatpush1.msra.mxu0 0.0
    %680 = vmatprep.subr.mxu0 0.0
    %681 = vmatpush1.msra.mxu0 0.0
    %682 = vmatprep.subr.mxu0 0.0
    %683 = vmatpush1.msra.mxu0 0.0
    %684 = vmatprep.subr.mxu0 0.0
    %685 = vmatpush1.msra.mxu0 0.0
    %686 = vmatprep.subr.mxu0 0.0
    %687 = vmatpush1.msra.mxu0 0.0
    %688 = vmatprep.subr.mxu0 0.0
    %689 = vmatpush1.msra.mxu0 0.0
    %690 = vmatprep.subr.mxu0 0.0
    %691 = vmatpush1.msra.mxu0 0.0
    %692 = vmatprep.subr.mxu0 0.0
    %693 = vmatpush1.msra.mxu0 0.0
    %694 = vmatprep.mubr.f32.mxu0 0.0
    %695 = vmatmul.mubr.f32.gmra.mrb[0].mxu0 %v625
    %v696 = vpop.f32.mrb[0].mxu0
    %v697 = vadd.f32 %v498, %v696
    %v698 = vpop.f32.mrb[0].mxu0
    %699 = vmatprep.mubr.f32.mxu0 0.0
    %700 = vmatmul.mubr.f32.gmra.mrb[0].mxu0 %v628
    %v701 = vpop.f32.mrb[0].mxu0
    %v702 = vadd.f32 %v499, %v701
    %v703 = vpop.f32.mrb[0].mxu0
    %704 = vdwg.mxu0
    %v705 = vsel %vm512, %v697, -inf
    %706 = vmax.xlane.f32.xlu0 %v705
    %v707 = vpop.xlane.xlu0 %706
    %v708 = vsel %vm512, %v702, -inf
    %709 = vmax.xlane.f32.xlu0 %v708
    %v710 = vpop.xlane.xlu0 %709
    %v711 = vsub.f32 %v697, %v707
    %v712 = vsub.f32 %v702, %v710
    %v713 = vmul.f32 %v711, 1.442695
    %v714 = vpow.pop %v713
    %v715 = vmul.f32 %v712, 1.442695
    %v716 = vpow.pop %v715
    %v717 = vsel %vm512, %v714, 0.0
    %718 = vadd.xlane.f32.xlu0 %v717
    %v719 = vpop.xlane.xlu0 %718
    %v720 = vsel %vm512, %v716, 0.0
    %721 = vadd.xlane.f32.xlu0 %v720
    %v722 = vpop.xlane.xlu0 %721
    %v723 = vrcp.pop %v719
    %v724 = vrcp.pop %v722
    %v725 = vmul.f32 %v714, %v723
    %v726 = vmul.f32 %v716, %v724
    %v728 = vsel %vm512, %v614, 0
    %v731 = vsel %vm512, %v615, 0
    %733 = vmatprep.subr.mxu0 0.0
    %734 = vmatpush1.msra.mxu0 %v121
    %735 = vmatprep.subr.mxu0 0.0
    %736 = vmatpush1.msra.mxu0 %v122
    %737 = vmatprep.subr.mxu0 0.0
    %738 = vmatpush1.msra.mxu0 0.0
    %739 = vmatprep.subr.mxu0 0.0
    %740 = vmatpush1.msra.mxu0 0.0
    %741 = vmatprep.subr.mxu0 0.0
    %742 = vmatpush1.msra.mxu0 0.0
    %743 = vmatprep.subr.mxu0 0.0
    %744 = vmatpush1.msra.mxu0 0.0
    %745 = vmatprep.subr.mxu0 0.0
    %746 = vmatpush1.msra.mxu0 0.0
    %747 = vmatprep.subr.mxu0 0.0
    %748 = vmatpush1.msra.mxu0 0.0
    %749 = vmatprep.subr.mxu0 0.0
    %750 = vmatpush1.msra.mxu0 0.0
    %751 = vmatprep.subr.mxu0 0.0
    %752 = vmatpush1.msra.mxu0 0.0
    %753 = vmatprep.subr.mxu0 0.0
    %754 = vmatpush1.msra.mxu0 0.0
    %755 = vmatprep.subr.mxu0 0.0
    %756 = vmatpush1.msra.mxu0 0.0
    %757 = vmatprep.subr.mxu0 0.0
    %758 = vmatpush1.msra.mxu0 0.0
    %759 = vmatprep.subr.mxu0 0.0
    %760 = vmatpush1.msra.mxu0 0.0
    %761 = vmatprep.subr.mxu0 0.0
    %762 = vmatpush1.msra.mxu0 0.0
    %763 = vmatprep.subr.mxu0 0.0
    %764 = vmatpush1.msra.mxu0 0.0
    %765 = vmatprep.subr.mxu0 0.0
    %766 = vmatpush1.msra.mxu0 0.0
    %767 = vmatprep.subr.mxu0 0.0
    %768 = vmatpush1.msra.mxu0 0.0
    %769 = vmatprep.subr.mxu0 0.0
    %770 = vmatpush1.msra.mxu0 0.0
    %771 = vmatprep.subr.mxu0 0.0
    %772 = vmatpush1.msra.mxu0 0.0
    %773 = vmatprep.subr.mxu0 0.0
    %774 = vmatpush1.msra.mxu0 0.0
    %775 = vmatprep.subr.mxu0 0.0
    %776 = vmatpush1.msra.mxu0 0.0
    %777 = vmatprep.subr.mxu0 0.0
    %778 = vmatpush1.msra.mxu0 0.0
    %779 = vmatprep.subr.mxu0 0.0
    %780 = vmatpush1.msra.mxu0 0.0
    %781 = vmatprep.subr.mxu0 0.0
    %782 = vmatpush1.msra.mxu0 0.0
    %783 = vmatprep.subr.mxu0 0.0
    %784 = vmatpush1.msra.mxu0 0.0
    %785 = vmatprep.subr.mxu0 0.0
    %786 = vmatpush1.msra.mxu0 0.0
    %787 = vmatprep.subr.mxu0 0.0
    %788 = vmatpush1.msra.mxu0 0.0
    %789 = vmatprep.subr.mxu0 0.0
    %790 = vmatpush1.msra.mxu0 0.0
    %791 = vmatprep.subr.mxu0 0.0
    %792 = vmatpush1.msra.mxu0 0.0
    %793 = vmatprep.subr.mxu0 0.0
    %794 = vmatpush1.msra.mxu0 0.0
    %795 = vmatprep.subr.mxu0 0.0
    %796 = vmatpush1.msra.mxu0 0.0
    %797 = vmatprep.mubr.f32.mxu0 0.0
    %798 = vmatmul.mubr.f32.gmra.mrb[0].mxu0 %v728
    %v799 = vpop.f32.mrb[0].mxu0
    %v800 = vadd.f32 0.0, %v799
    %v801 = vpop.f32.mrb[0].mxu0
    %802 = vmatprep.mubr.f32.mxu0 0.0
    %803 = vmatmul.mubr.f32.gmra.mrb[0].mxu0 %v731
    %v804 = vpop.f32.mrb[0].mxu0
    %v805 = vadd.f32 0.0, %v804
    %v806 = vpop.f32.mrb[0].mxu0
    %807 = vdwg.mxu0
    %v809 = vsel %vm512, %v725, 0
    %v812 = vsel %vm512, %v726, 0
    %814 = vmatprep.subr.mxu0 0.0
    %815 = vmatpush1.msra.mxu0 %v121
    %816 = vmatprep.subr.mxu0 0.0
    %817 = vmatpush1.msra.mxu0 %v122
    %818 = vmatprep.subr.mxu0 0.0
    %819 = vmatpush1.msra.mxu0 0.0
    %820 = vmatprep.subr.mxu0 0.0
    %821 = vmatpush1.msra.mxu0 0.0
    %822 = vmatprep.subr.mxu0 0.0
    %823 = vmatpush1.msra.mxu0 0.0
    %824 = vmatprep.subr.mxu0 0.0
    %825 = vmatpush1.msra.mxu0 0.0
    %826 = vmatprep.subr.mxu0 0.0
    %827 = vmatpush1.msra.mxu0 0.0
    %828 = vmatprep.subr.mxu0 0.0
    %829 = vmatpush1.msra.mxu0 0.0
    %830 = vmatprep.subr.mxu0 0.0
    %831 = vmatpush1.msra.mxu0 0.0
    %832 = vmatprep.subr.mxu0 0.0
    %833 = vmatpush1.msra.mxu0 0.0
    %834 = vmatprep.subr.mxu0 0.0
    %835 = vmatpush1.msra.mxu0 0.0
    %836 = vmatprep.subr.mxu0 0.0
    %837 = vmatpush1.msra.mxu0 0.0
    %838 = vmatprep.subr.mxu0 0.0
    %839 = vmatpush1.msra.mxu0 0.0
    %840 = vmatprep.subr.mxu0 0.0
    %841 = vmatpush1.msra.mxu0 0.0
    %842 = vmatprep.subr.mxu0 0.0
    %843 = vmatpush1.msra.mxu0 0.0
    %844 = vmatprep.subr.mxu0 0.0
    %845 = vmatpush1.msra.mxu0 0.0
    %846 = vmatprep.subr.mxu0 0.0
    %847 = vmatpush1.msra.mxu0 0.0
    %848 = vmatprep.subr.mxu0 0.0
    %849 = vmatpush1.msra.mxu0 0.0
    %850 = vmatprep.subr.mxu0 0.0
    %851 = vmatpush1.msra.mxu0 0.0
    %852 = vmatprep.subr.mxu0 0.0
    %853 = vmatpush1.msra.mxu0 0.0
    %854 = vmatprep.subr.mxu0 0.0
    %855 = vmatpush1.msra.mxu0 0.0
    %856 = vmatprep.subr.mxu0 0.0
    %857 = vmatpush1.msra.mxu0 0.0
    %858 = vmatprep.subr.mxu0 0.0
    %859 = vmatpush1.msra.mxu0 0.0
    %860 = vmatprep.subr.mxu0 0.0
    %861 = vmatpush1.msra.mxu0 0.0
    %862 = vmatprep.subr.mxu0 0.0
    %863 = vmatpush1.msra.mxu0 0.0
    %864 = vmatprep.subr.mxu0 0.0
    %865 = vmatpush1.msra.mxu0 0.0
    %866 = vmatprep.subr.mxu0 0.0
    %867 = vmatpush1.msra.mxu0 0.0
    %868 = vmatprep.subr.mxu0 0.0
    %869 = vmatpush1.msra.mxu0 0.0
    %870 = vmatprep.subr.mxu0 0.0
    %871 = vmatpush1.msra.mxu0 0.0
    %872 = vmatprep.subr.mxu0 0.0
    %873 = vmatpush1.msra.mxu0 0.0
    %874 = vmatprep.subr.mxu0 0.0
    %875 = vmatpush1.msra.mxu0 0.0
    %876 = vmatprep.subr.mxu0 0.0
    %877 = vmatpush1.msra.mxu0 0.0
    %878 = vmatprep.mubr.f32.mxu0 0.0
    %879 = vmatmul.mubr.f32.gmra.mrb[0].mxu0 %v809
    %v880 = vpop.f32.mrb[0].mxu0
    %v881 = vadd.f32 0.0, %v880
    %v882 = vpop.f32.mrb[0].mxu0
    %883 = vmatprep.mubr.f32.mxu0 0.0
    %884 = vmatmul.mubr.f32.gmra.mrb[0].mxu0 %v812
    %v885 = vpop.f32.mrb[0].mxu0
    %v886 = vadd.f32 0.0, %v885
    %v887 = vpop.f32.mrb[0].mxu0
    %888 = vdwg.mxu0
    %vm889 = vcmp.eq.s32.totalorder %v511, 0
    %v890 = vsel %vm889, %v800, %v881
    %v891 = vsel %vm889, %v805, %v886
    %894 = vrot.lane.b32.xlu0 %v468, 96
    %v895 = vpop.permute.xlu0 %894
    %896 = vrot.lane.b32.xlu0 %v469, 96
    %v897 = vpop.permute.xlu0 %896
    %v900 = vadd.f32 %v890, %v895
    %v901 = vadd.f32 %v891, %v897
    %v903 = vlaneseq
    %v904 = vshrl.u32 %v903, 7
    %v905 = vsub.s32 0, %v904
    %v906 = vrot.slane %v507, %v905
    %910 = vrot.lane.b32.xlu0 %v488, 124
    %v911 = vpop.permute.xlu0 %910
    %912 = vrot.lane.b32.xlu0 %v489, 124
    %v913 = vpop.permute.xlu0 %912
    %v917 = vsel %vm512, %v500, 0
    %v920 = vsel %vm512, %v501, 0
    %922 = vmatprep.subr.mxu0 0.0
    %923 = vmatpush1.msra.mxu0 %v911
    %924 = vmatprep.subr.mxu0 0.0
    %925 = vmatpush1.msra.mxu0 %v913
    %926 = vmatprep.subr.mxu0 0.0
    %927 = vmatpush1.msra.mxu0 0.0
    %928 = vmatprep.subr.mxu0 0.0
    %929 = vmatpush1.msra.mxu0 0.0
    %930 = vmatprep.subr.mxu0 0.0
    %931 = vmatpush1.msra.mxu0 0.0
    %932 = vmatprep.subr.mxu0 0.0
    %933 = vmatpush1.msra.mxu0 0.0
    %934 = vmatprep.subr.mxu0 0.0
    %935 = vmatpush1.msra.mxu0 0.0
    %936 = vmatprep.subr.mxu0 0.0
    %937 = vmatpush1.msra.mxu0 0.0
    %938 = vmatprep.subr.mxu0 0.0
    %939 = vmatpush1.msra.mxu0 0.0
    %940 = vmatprep.subr.mxu0 0.0
    %941 = vmatpush1.msra.mxu0 0.0
    %942 = vmatprep.subr.mxu0 0.0
    %943 = vmatpush1.msra.mxu0 0.0
    %944 = vmatprep.subr.mxu0 0.0
    %945 = vmatpush1.msra.mxu0 0.0
    %946 = vmatprep.subr.mxu0 0.0
    %947 = vmatpush1.msra.mxu0 0.0
    %948 = vmatprep.subr.mxu0 0.0
    %949 = vmatpush1.msra.mxu0 0.0
    %950 = vmatprep.subr.mxu0 0.0
    %951 = vmatpush1.msra.mxu0 0.0
    %952 = vmatprep.subr.mxu0 0.0
    %953 = vmatpush1.msra.mxu0 0.0
    %954 = vmatprep.subr.mxu0 0.0
    %955 = vmatpush1.msra.mxu0 0.0
    %956 = vmatprep.subr.mxu0 0.0
    %957 = vmatpush1.msra.mxu0 0.0
    %958 = vmatprep.subr.mxu0 0.0
    %959 = vmatpush1.msra.mxu0 0.0
    %960 = vmatprep.subr.mxu0 0.0
    %961 = vmatpush1.msra.mxu0 0.0
    %962 = vmatprep.subr.mxu0 0.0
    %963 = vmatpush1.msra.mxu0 0.0
    %964 = vmatprep.subr.mxu0 0.0
    %965 = vmatpush1.msra.mxu0 0.0
    %966 = vmatprep.subr.mxu0 0.0
    %967 = vmatpush1.msra.mxu0 0.0
    %968 = vmatprep.subr.mxu0 0.0
    %969 = vmatpush1.msra.mxu0 0.0
    %970 = vmatprep.subr.mxu0 0.0
    %971 = vmatpush1.msra.mxu0 0.0
    %972 = vmatprep.subr.mxu0 0.0
    %973 = vmatpush1.msra.mxu0 0.0
    %974 = vmatprep.subr.mxu0 0.0
    %975 = vmatpush1.msra.mxu0 0.0
    %976 = vmatprep.subr.mxu0 0.0
    %977 = vmatpush1.msra.mxu0 0.0
    %978 = vmatprep.subr.mxu0 0.0
    %979 = vmatpush1.msra.mxu0 0.0
    %980 = vmatprep.subr.mxu0 0.0
    %981 = vmatpush1.msra.mxu0 0.0
    %982 = vmatprep.subr.mxu0 0.0
    %983 = vmatpush1.msra.mxu0 0.0
    %984 = vmatprep.subr.mxu0 0.0
    %985 = vmatpush1.msra.mxu0 0.0
    %986 = vmatprep.mubr.f32.mxu0 0.0
    %987 = vmatmul.mubr.f32.gmra.mrb[0].mxu0 %v917
    %v988 = vpop.f32.mrb[0].mxu0
    %v989 = vadd.f32 %v906, %v988
    %v990 = vpop.f32.mrb[0].mxu0
    %991 = vmatprep.mubr.f32.mxu0 0.0
    %992 = vmatmul.mubr.f32.gmra.mrb[0].mxu0 %v920
    %v993 = vpop.f32.mrb[0].mxu0
    %v994 = vadd.f32 %v906, %v993
    %v995 = vpop.f32.mrb[0].mxu0
    %996 = vdwg.mxu0
    %v997 = vxor.u32 %v989, 2147483648
    %v998 = vxor.u32 %v994, 2147483648
    %v999 = vmul.f32 %v997, 1.442695
    %v1000 = vpow.pop %v999
    %v1001 = vmul.f32 %v998, 1.442695
    %v1002 = vpow.pop %v1001
    %v1003 = vadd.f32 %v1000, 1.0
    %v1004 = vadd.f32 %v1002, 1.0
    %v1005 = vrcp.pop %v1003
    %v1006 = vmul.f32 1.0, %v1005
    %v1007 = vrcp.pop %v1004
    %v1008 = vmul.f32 1.0, %v1007
    %v1010 = vlaneseq
    %v1011 = vshrl.u32 %v1010, 7
    %v1012 = vsub.s32 0, %v1011
    %v1013 = vrot.slane %v508, %v1012
    %1015 = vrot.lane.b32.xlu0 %v488, 120
    %v1016 = vpop.permute.xlu0 %1015
    %1017 = vrot.lane.b32.xlu0 %v489, 120
    %v1018 = vpop.permute.xlu0 %1017
    %v1022 = vsel %vm512, %v502, 0
    %v1025 = vsel %vm512, %v503, 0
    %1027 = vmatprep.subr.mxu0 0.0
    %1028 = vmatpush1.msra.mxu0 %v1016
    %1029 = vmatprep.subr.mxu0 0.0
    %1030 = vmatpush1.msra.mxu0 %v1018
    %1031 = vmatprep.subr.mxu0 0.0
    %1032 = vmatpush1.msra.mxu0 0.0
    %1033 = vmatprep.subr.mxu0 0.0
    %1034 = vmatpush1.msra.mxu0 0.0
    %1035 = vmatprep.subr.mxu0 0.0
    %1036 = vmatpush1.msra.mxu0 0.0
    %1037 = vmatprep.subr.mxu0 0.0
    %1038 = vmatpush1.msra.mxu0 0.0
    %1039 = vmatprep.subr.mxu0 0.0
    %1040 = vmatpush1.msra.mxu0 0.0
    %1041 = vmatprep.subr.mxu0 0.0
    %1042 = vmatpush1.msra.mxu0 0.0
    %1043 = vmatprep.subr.mxu0 0.0
    %1044 = vmatpush1.msra.mxu0 0.0
    %1045 = vmatprep.subr.mxu0 0.0
    %1046 = vmatpush1.msra.mxu0 0.0
    %1047 = vmatprep.subr.mxu0 0.0
    %1048 = vmatpush1.msra.mxu0 0.0
    %1049 = vmatprep.subr.mxu0 0.0
    %1050 = vmatpush1.msra.mxu0 0.0
    %1051 = vmatprep.subr.mxu0 0.0
    %1052 = vmatpush1.msra.mxu0 0.0
    %1053 = vmatprep.subr.mxu0 0.0
    %1054 = vmatpush1.msra.mxu0 0.0
    %1055 = vmatprep.subr.mxu0 0.0
    %1056 = vmatpush1.msra.mxu0 0.0
    %1057 = vmatprep.subr.mxu0 0.0
    %1058 = vmatpush1.msra.mxu0 0.0
    %1059 = vmatprep.subr.mxu0 0.0
    %1060 = vmatpush1.msra.mxu0 0.0
    %1061 = vmatprep.subr.mxu0 0.0
    %1062 = vmatpush1.msra.mxu0 0.0
    %1063 = vmatprep.subr.mxu0 0.0
    %1064 = vmatpush1.msra.mxu0 0.0
    %1065 = vmatprep.subr.mxu0 0.0
    %1066 = vmatpush1.msra.mxu0 0.0
    %1067 = vmatprep.subr.mxu0 0.0
    %1068 = vmatpush1.msra.mxu0 0.0
    %1069 = vmatprep.subr.mxu0 0.0
    %1070 = vmatpush1.msra.mxu0 0.0
    %1071 = vmatprep.subr.mxu0 0.0
    %1072 = vmatpush1.msra.mxu0 0.0
    %1073 = vmatprep.subr.mxu0 0.0
    %1074 = vmatpush1.msra.mxu0 0.0
    %1075 = vmatprep.subr.mxu0 0.0
    %1076 = vmatpush1.msra.mxu0 0.0
    %1077 = vmatprep.subr.mxu0 0.0
    %1078 = vmatpush1.msra.mxu0 0.0
    %1079 = vmatprep.subr.mxu0 0.0
    %1080 = vmatpush1.msra.mxu0 0.0
    %1081 = vmatprep.subr.mxu0 0.0
    %1082 = vmatpush1.msra.mxu0 0.0
    %1083 = vmatprep.subr.mxu0 0.0
    %1084 = vmatpush1.msra.mxu0 0.0
    %1085 = vmatprep.subr.mxu0 0.0
    %1086 = vmatpush1.msra.mxu0 0.0
    %1087 = vmatprep.subr.mxu0 0.0
    %1088 = vmatpush1.msra.mxu0 0.0
    %1089 = vmatprep.subr.mxu0 0.0
    %1090 = vmatpush1.msra.mxu0 0.0
    %1091 = vmatprep.mubr.f32.mxu0 0.0
    %1092 = vmatmul.mubr.f32.gmra.mrb[0].mxu0 %v1022
    %v1093 = vpop.f32.mrb[0].mxu0
    %v1094 = vadd.f32 %v1013, %v1093
    %v1095 = vpop.f32.mrb[0].mxu0
    %1096 = vmatprep.mubr.f32.mxu0 0.0
    %1097 = vmatmul.mubr.f32.gmra.mrb[0].mxu0 %v1025
    %v1098 = vpop.f32.mrb[0].mxu0
    %v1099 = vadd.f32 %v1013, %v1098
    %v1100 = vpop.f32.mrb[0].mxu0
    %1101 = vdwg.mxu0
    %v1102 = vxor.u32 %v1094, 2147483648
    %v1103 = vxor.u32 %v1099, 2147483648
    %v1104 = vmul.f32 %v1102, 1.442695
    %v1105 = vpow.pop %v1104
    %v1106 = vmul.f32 %v1103, 1.442695
    %v1107 = vpow.pop %v1106
    %v1108 = vadd.f32 %v1105, 1.0
    %v1109 = vadd.f32 %v1107, 1.0
    %v1110 = vrcp.pop %v1108
    %v1111 = vmul.f32 1.0, %v1110
    %v1112 = vrcp.pop %v1109
    %v1113 = vmul.f32 1.0, %v1112
    %v1114 = vmul.f32 %v1006, %v125
    %v1115 = vmul.f32 %v1008, %v126
    %v1117 = vsel %vm233, %v1114, 0
    %v1120 = vsel %vm233, %v1115, 0
    %v1123 = vsel %vm246, %v506, 0
    %1125 = vmatprep.subr.mxu0 0.0
    %1126 = vmatpush1.msra.mxu0 %v1123
    %1127 = vmatprep.subr.mxu0 0.0
    %1128 = vmatpush1.msra.mxu0 0.0
    %1129 = vmatprep.subr.mxu0 0.0
    %1130 = vmatpush1.msra.mxu0 0.0
    %1131 = vmatprep.subr.mxu0 0.0
    %1132 = vmatpush1.msra.mxu0 0.0
    %1133 = vmatprep.subr.mxu0 0.0
    %1134 = vmatpush1.msra.mxu0 0.0
    %1135 = vmatprep.subr.mxu0 0.0
    %1136 = vmatpush1.msra.mxu0 0.0
    %1137 = vmatprep.subr.mxu0 0.0
    %1138 = vmatpush1.msra.mxu0 0.0
    %1139 = vmatprep.subr.mxu0 0.0
    %1140 = vmatpush1.msra.mxu0 0.0
    %1141 = vmatprep.subr.mxu0 0.0
    %1142 = vmatpush1.msra.mxu0 0.0
    %1143 = vmatprep.subr.mxu0 0.0
    %1144 = vmatpush1.msra.mxu0 0.0
    %1145 = vmatprep.subr.mxu0 0.0
    %1146 = vmatpush1.msra.mxu0 0.0
    %1147 = vmatprep.subr.mxu0 0.0
    %1148 = vmatpush1.msra.mxu0 0.0
    %1149 = vmatprep.subr.mxu0 0.0
    %1150 = vmatpush1.msra.mxu0 0.0
    %1151 = vmatprep.subr.mxu0 0.0
    %1152 = vmatpush1.msra.mxu0 0.0
    %1153 = vmatprep.subr.mxu0 0.0
    %1154 = vmatpush1.msra.mxu0 0.0
    %1155 = vmatprep.subr.mxu0 0.0
    %1156 = vmatpush1.msra.mxu0 0.0
    %1157 = vmatprep.subr.mxu0 0.0
    %1158 = vmatpush1.msra.mxu0 0.0
    %1159 = vmatprep.subr.mxu0 0.0
    %1160 = vmatpush1.msra.mxu0 0.0
    %1161 = vmatprep.subr.mxu0 0.0
    %1162 = vmatpush1.msra.mxu0 0.0
    %1163 = vmatprep.subr.mxu0 0.0
    %1164 = vmatpush1.msra.mxu0 0.0
    %1165 = vmatprep.subr.mxu0 0.0
    %1166 = vmatpush1.msra.mxu0 0.0
    %1167 = vmatprep.subr.mxu0 0.0
    %1168 = vmatpush1.msra.mxu0 0.0
    %1169 = vmatprep.subr.mxu0 0.0
    %1170 = vmatpush1.msra.mxu0 0.0
    %1171 = vmatprep.subr.mxu0 0.0
    %1172 = vmatpush1.msra.mxu0 0.0
    %1173 = vmatprep.subr.mxu0 0.0
    %1174 = vmatpush1.msra.mxu0 0.0
    %1175 = vmatprep.subr.mxu0 0.0
    %1176 = vmatpush1.msra.mxu0 0.0
    %1177 = vmatprep.subr.mxu0 0.0
    %1178 = vmatpush1.msra.mxu0 0.0
    %1179 = vmatprep.subr.mxu0 0.0
    %1180 = vmatpush1.msra.mxu0 0.0
    %1181 = vmatprep.subr.mxu0 0.0
    %1182 = vmatpush1.msra.mxu0 0.0
    %1183 = vmatprep.subr.mxu0 0.0
    %1184 = vmatpush1.msra.mxu0 0.0
    %1185 = vmatprep.subr.mxu0 0.0
    %1186 = vmatpush1.msra.mxu0 0.0
    %1187 = vmatprep.subr.mxu0 0.0
    %1188 = vmatpush1.msra.mxu0 0.0
    %1189 = vmatprep.mubr.f32.mxu0 0.0
    %1190 = vmatmul.mubr.f32.gmra.mrb[0].mxu0 %v1117
    %v1191 = vpop.f32.mrb[0].mxu0
    %v1192 = vadd.f32 0.0, %v1191
    %v1193 = vpop.f32.mrb[0].mxu0
    %1194 = vmatprep.mubr.f32.mxu0 0.0
    %1195 = vmatmul.mubr.f32.gmra.mrb[0].mxu0 %v1120
    %v1196 = vpop.f32.mrb[0].mxu0
    %v1197 = vadd.f32 0.0, %v1196
    %v1198 = vpop.f32.mrb[0].mxu0
    %1199 = vdwg.mxu0
    %1202 = vrot.lane.b32.xlu0 %v1192, 34
    %v1203 = vpop.permute.xlu0 %1202
    %1204 = vrot.lane.b32.xlu0 %v1197, 34
    %v1205 = vpop.permute.xlu0 %1204
    %v1208 = vadd.f32 %v429, %v1203
    %v1209 = vadd.f32 %v434, %v1205
    %v1211 = vlaneseq
    %v1212 = vshrl.u32 %v1211, 7
    %v1213 = vsub.s32 0, %v1212
    %v1214 = vrot.slane %v509, %v1213
    %1218 = vrot.lane.b32.xlu0 %v1208, 94
    %v1219 = vpop.permute.xlu0 %1218
    %1220 = vrot.lane.b32.xlu0 %v1209, 94
    %v1221 = vpop.permute.xlu0 %1220
    %v1225 = vsel %vm512, %v504, 0
    %v1228 = vsel %vm512, %v505, 0
    %1230 = vmatprep.subr.mxu0 0.0
    %1231 = vmatpush1.msra.mxu0 %v1219
    %1232 = vmatprep.subr.mxu0 0.0
    %1233 = vmatpush1.msra.mxu0 %v1221
    %1234 = vmatprep.subr.mxu0 0.0
    %1235 = vmatpush1.msra.mxu0 0.0
    %1236 = vmatprep.subr.mxu0 0.0
    %1237 = vmatpush1.msra.mxu0 0.0
    %1238 = vmatprep.subr.mxu0 0.0
    %1239 = vmatpush1.msra.mxu0 0.0
    %1240 = vmatprep.subr.mxu0 0.0
    %1241 = vmatpush1.msra.mxu0 0.0
    %1242 = vmatprep.subr.mxu0 0.0
    %1243 = vmatpush1.msra.mxu0 0.0
    %1244 = vmatprep.subr.mxu0 0.0
    %1245 = vmatpush1.msra.mxu0 0.0
    %1246 = vmatprep.subr.mxu0 0.0
    %1247 = vmatpush1.msra.mxu0 0.0
    %1248 = vmatprep.subr.mxu0 0.0
    %1249 = vmatpush1.msra.mxu0 0.0
    %1250 = vmatprep.subr.mxu0 0.0
    %1251 = vmatpush1.msra.mxu0 0.0
    %1252 = vmatprep.subr.mxu0 0.0
    %1253 = vmatpush1.msra.mxu0 0.0
    %1254 = vmatprep.subr.mxu0 0.0
    %1255 = vmatpush1.msra.mxu0 0.0
    %1256 = vmatprep.subr.mxu0 0.0
    %1257 = vmatpush1.msra.mxu0 0.0
    %1258 = vmatprep.subr.mxu0 0.0
    %1259 = vmatpush1.msra.mxu0 0.0
    %1260 = vmatprep.subr.mxu0 0.0
    %1261 = vmatpush1.msra.mxu0 0.0
    %1262 = vmatprep.subr.mxu0 0.0
    %1263 = vmatpush1.msra.mxu0 0.0
    %1264 = vmatprep.subr.mxu0 0.0
    %1265 = vmatpush1.msra.mxu0 0.0
    %1266 = vmatprep.subr.mxu0 0.0
    %1267 = vmatpush1.msra.mxu0 0.0
    %1268 = vmatprep.subr.mxu0 0.0
    %1269 = vmatpush1.msra.mxu0 0.0
    %1270 = vmatprep.subr.mxu0 0.0
    %1271 = vmatpush1.msra.mxu0 0.0
    %1272 = vmatprep.subr.mxu0 0.0
    %1273 = vmatpush1.msra.mxu0 0.0
    %1274 = vmatprep.subr.mxu0 0.0
    %1275 = vmatpush1.msra.mxu0 0.0
    %1276 = vmatprep.subr.mxu0 0.0
    %1277 = vmatpush1.msra.mxu0 0.0
    %1278 = vmatprep.subr.mxu0 0.0
    %1279 = vmatpush1.msra.mxu0 0.0
    %1280 = vmatprep.subr.mxu0 0.0
    %1281 = vmatpush1.msra.mxu0 0.0
    %1282 = vmatprep.subr.mxu0 0.0
    %1283 = vmatpush1.msra.mxu0 0.0
    %1284 = vmatprep.subr.mxu0 0.0
    %1285 = vmatpush1.msra.mxu0 0.0
    %1286 = vmatprep.subr.mxu0 0.0
    %1287 = vmatpush1.msra.mxu0 0.0
    %1288 = vmatprep.subr.mxu0 0.0
    %1289 = vmatpush1.msra.mxu0 0.0
    %1290 = vmatprep.subr.mxu0 0.0
    %1291 = vmatpush1.msra.mxu0 0.0
    %1292 = vmatprep.subr.mxu0 0.0
    %1293 = vmatpush1.msra.mxu0 0.0
    %1294 = vmatprep.mubr.f32.mxu0 0.0
    %1295 = vmatmul.mubr.f32.gmra.mrb[0].mxu0 %v1225
    %v1296 = vpop.f32.mrb[0].mxu0
    %v1297 = vadd.f32 %v1214, %v1296
    %v1298 = vpop.f32.mrb[0].mxu0
    %1299 = vmatprep.mubr.f32.mxu0 0.0
    %1300 = vmatmul.mubr.f32.gmra.mrb[0].mxu0 %v1228
    %v1301 = vpop.f32.mrb[0].mxu0
    %v1302 = vadd.f32 %v1214, %v1301
    %v1303 = vpop.f32.mrb[0].mxu0
    %1304 = vdwg.mxu0
    %v1305 = vtanh.pop %v1297
    %v1306 = vtanh.pop %v1302
    %v1307 = vmul.f32 %v1111, %v125
    %v1308 = vmul.f32 %v1113, %v126
    %v1309 = vsub.f32 1.0, %v1111
    %v1310 = vsub.f32 1.0, %v1113
    %v1311 = vmul.f32 %v1309, %v1305
    %v1312 = vmul.f32 %v1310, %v1306
    %v1313 = vadd.f32 %v1307, %v1311
    %v1314 = vadd.f32 %v1308, %v1312
    %vm1315 = vcmask 15360
    %1316 = vst.msk [vmem:[%s18] sm:$0xff] %vm1315, %v900
    %1317 = vst.msk [vmem:[%s18 + $0x8] sm:$0xff] %vm1315, %v901
    %1318 = vst.msk [vmem:[%s19] sm:$0xff] %vm233, %v1313
    %1319 = vst.msk [vmem:[%s19 + $0x8] sm:$0xff] %vm233, %v1314
    %1320 = vmatprep.subr.mxu0 0.0
    %1321 = vmatpush1.msra.mxu0 %v449
    %1322 = vmatprep.subr.mxu0 0.0
    %1323 = vmatpush1.msra.mxu0 %v450
    %1324 = vmatprep.subr.mxu0 0.0
    %1325 = vmatpush1.msra.mxu0 0.0
    %1326 = vmatprep.subr.mxu0 0.0
    %1327 = vmatpush1.msra.mxu0 0.0
    %1328 = vmatprep.subr.mxu0 0.0
    %1329 = vmatpush1.msra.mxu0 0.0
    %1330 = vmatprep.subr.mxu0 0.0
    %1331 = vmatpush1.msra.mxu0 0.0
    %1332 = vmatprep.subr.mxu0 0.0
    %1333 = vmatpush1.msra.mxu0 0.0
    %1334 = vmatprep.subr.mxu0 0.0
    %1335 = vmatpush1.msra.mxu0 0.0
    %1336 = vmatprep.subr.mxu0 0.0
    %1337 = vmatpush1.msra.mxu0 0.0
    %1338 = vmatprep.subr.mxu0 0.0
    %1339 = vmatpush1.msra.mxu0 0.0
    %1340 = vmatprep.subr.mxu0 0.0
    %1341 = vmatpush1.msra.mxu0 0.0
    %1342 = vmatprep.subr.mxu0 0.0
    %1343 = vmatpush1.msra.mxu0 0.0
    %1344 = vmatprep.subr.mxu0 0.0
    %1345 = vmatpush1.msra.mxu0 0.0
    %1346 = vmatprep.subr.mxu0 0.0
    %1347 = vmatpush1.msra.mxu0 0.0
    %1348 = vmatprep.subr.mxu0 0.0
    %1349 = vmatpush1.msra.mxu0 0.0
    %1350 = vmatprep.subr.mxu0 0.0
    %1351 = vmatpush1.msra.mxu0 0.0
    %1352 = vmatprep.subr.mxu0 0.0
    %1353 = vmatpush1.msra.mxu0 0.0
    %1354 = vmatprep.subr.mxu0 0.0
    %1355 = vmatpush1.msra.mxu0 0.0
    %1356 = vmatprep.subr.mxu0 0.0
    %1357 = vmatpush1.msra.mxu0 0.0
    %1358 = vmatprep.subr.mxu0 0.0
    %1359 = vmatpush1.msra.mxu0 0.0
    %1360 = vmatprep.subr.mxu0 0.0
    %1361 = vmatpush1.msra.mxu0 0.0
    %1362 = vmatprep.subr.mxu0 0.0
    %1363 = vmatpush1.msra.mxu0 0.0
    %1364 = vmatprep.subr.mxu0 0.0
    %1365 = vmatpush1.msra.mxu0 0.0
    %1366 = vmatprep.subr.mxu0 0.0
    %1367 = vmatpush1.msra.mxu0 0.0
    %1368 = vmatprep.subr.mxu0 0.0
    %1369 = vmatpush1.msra.mxu0 0.0
    %1370 = vmatprep.subr.mxu0 0.0
    %1371 = vmatpush1.msra.mxu0 0.0
    %1372 = vmatprep.subr.mxu0 0.0
    %1373 = vmatpush1.msra.mxu0 0.0
    %1374 = vmatprep.subr.mxu0 0.0
    %1375 = vmatpush1.msra.mxu0 0.0
    %1376 = vmatprep.subr.mxu0 0.0
    %1377 = vmatpush1.msra.mxu0 0.0
    %1378 = vmatprep.subr.mxu0 0.0
    %1379 = vmatpush1.msra.mxu0 0.0
    %1380 = vmatprep.subr.mxu0 0.0
    %1381 = vmatpush1.msra.mxu0 0.0
    %1382 = vmatprep.subr.mxu0 0.0
    %1383 = vmatpush1.msra.mxu0 0.0
    %1384 = vmatprep.mubr.f32.mxu0 0.0
    %1385 = vmatmul.mubr.f32.gmra.mrb[0].mxu0 %v514
    %v1386 = vpop.f32.mrb[0].mxu0
    %v1387 = vadd.f32 %v496, %v1386
    %v1388 = vpop.f32.mrb[0].mxu0
    %1389 = vmatprep.mubr.f32.mxu0 0.0
    %1390 = vmatmul.mubr.f32.gmra.mrb[0].mxu0 %v517
    %v1391 = vpop.f32.mrb[0].mxu0
    %v1392 = vadd.f32 %v497, %v1391
    %v1393 = vpop.f32.mrb[0].mxu0
    %1394 = vdwg.mxu0
    %v1395 = vsel %vm512, %v1387, -inf
    %1396 = vmax.xlane.f32.xlu0 %v1395
    %v1397 = vpop.xlane.xlu0 %1396
    %v1398 = vsel %vm512, %v1392, -inf
    %1399 = vmax.xlane.f32.xlu0 %v1398
    %v1400 = vpop.xlane.xlu0 %1399
    %v1401 = vsub.f32 %v1387, %v1397
    %v1402 = vsub.f32 %v1392, %v1400
    %v1403 = vmul.f32 %v1401, 1.442695
    %v1404 = vpow.pop %v1403
    %v1405 = vmul.f32 %v1402, 1.442695
    %v1406 = vpow.pop %v1405
    %v1407 = vsel %vm512, %v1404, 0.0
    %1408 = vadd.xlane.f32.xlu0 %v1407
    %v1409 = vpop.xlane.xlu0 %1408
    %v1410 = vsel %vm512, %v1406, 0.0
    %1411 = vadd.xlane.f32.xlu0 %v1410
    %v1412 = vpop.xlane.xlu0 %1411
    %v1413 = vrcp.pop %v1409
    %v1414 = vrcp.pop %v1412
    %v1415 = vmul.f32 %v1404, %v1413
    %v1416 = vmul.f32 %v1406, %v1414
    %1419 = vrot.lane.b32.xlu0 %v449, 112
    %v1420 = vpop.permute.xlu0 %1419
    %1421 = vrot.lane.b32.xlu0 %v450, 112
    %v1422 = vpop.permute.xlu0 %1421
    %1425 = vmatprep.subr.mxu0 0.0
    %1426 = vmatpush1.msra.mxu0 %v1420
    %1427 = vmatprep.subr.mxu0 0.0
    %1428 = vmatpush1.msra.mxu0 %v1422
    %1429 = vmatprep.subr.mxu0 0.0
    %1430 = vmatpush1.msra.mxu0 0.0
    %1431 = vmatprep.subr.mxu0 0.0
    %1432 = vmatpush1.msra.mxu0 0.0
    %1433 = vmatprep.subr.mxu0 0.0
    %1434 = vmatpush1.msra.mxu0 0.0
    %1435 = vmatprep.subr.mxu0 0.0
    %1436 = vmatpush1.msra.mxu0 0.0
    %1437 = vmatprep.subr.mxu0 0.0
    %1438 = vmatpush1.msra.mxu0 0.0
    %1439 = vmatprep.subr.mxu0 0.0
    %1440 = vmatpush1.msra.mxu0 0.0
    %1441 = vmatprep.subr.mxu0 0.0
    %1442 = vmatpush1.msra.mxu0 0.0
    %1443 = vmatprep.subr.mxu0 0.0
    %1444 = vmatpush1.msra.mxu0 0.0
    %1445 = vmatprep.subr.mxu0 0.0
    %1446 = vmatpush1.msra.mxu0 0.0
    %1447 = vmatprep.subr.mxu0 0.0
    %1448 = vmatpush1.msra.mxu0 0.0
    %1449 = vmatprep.subr.mxu0 0.0
    %1450 = vmatpush1.msra.mxu0 0.0
    %1451 = vmatprep.subr.mxu0 0.0
    %1452 = vmatpush1.msra.mxu0 0.0
    %1453 = vmatprep.subr.mxu0 0.0
    %1454 = vmatpush1.msra.mxu0 0.0
    %1455 = vmatprep.subr.mxu0 0.0
    %1456 = vmatpush1.msra.mxu0 0.0
    %1457 = vmatprep.subr.mxu0 0.0
    %1458 = vmatpush1.msra.mxu0 0.0
    %1459 = vmatprep.subr.mxu0 0.0
    %1460 = vmatpush1.msra.mxu0 0.0
    %1461 = vmatprep.subr.mxu0 0.0
    %1462 = vmatpush1.msra.mxu0 0.0
    %1463 = vmatprep.subr.mxu0 0.0
    %1464 = vmatpush1.msra.mxu0 0.0
    %1465 = vmatprep.subr.mxu0 0.0
    %1466 = vmatpush1.msra.mxu0 0.0
    %1467 = vmatprep.subr.mxu0 0.0
    %1468 = vmatpush1.msra.mxu0 0.0
    %1469 = vmatprep.subr.mxu0 0.0
    %1470 = vmatpush1.msra.mxu0 0.0
    %1471 = vmatprep.subr.mxu0 0.0
    %1472 = vmatpush1.msra.mxu0 0.0
    %1473 = vmatprep.subr.mxu0 0.0
    %1474 = vmatpush1.msra.mxu0 0.0
    %1475 = vmatprep.subr.mxu0 0.0
    %1476 = vmatpush1.msra.mxu0 0.0
    %1477 = vmatprep.subr.mxu0 0.0
    %1478 = vmatpush1.msra.mxu0 0.0
    %1479 = vmatprep.subr.mxu0 0.0
    %1480 = vmatpush1.msra.mxu0 0.0
    %1481 = vmatprep.subr.mxu0 0.0
    %1482 = vmatpush1.msra.mxu0 0.0
    %1483 = vmatprep.subr.mxu0 0.0
    %1484 = vmatpush1.msra.mxu0 0.0
    %1485 = vmatprep.subr.mxu0 0.0
    %1486 = vmatpush1.msra.mxu0 0.0
    %1487 = vmatprep.subr.mxu0 0.0
    %1488 = vmatpush1.msra.mxu0 0.0
    %1489 = vmatprep.mubr.f32.mxu0 0.0
    %1490 = vmatmul.mubr.f32.gmra.mrb[0].mxu0 %v625
    %v1491 = vpop.f32.mrb[0].mxu0
    %v1492 = vadd.f32 %v498, %v1491
    %v1493 = vpop.f32.mrb[0].mxu0
    %1494 = vmatprep.mubr.f32.mxu0 0.0
    %1495 = vmatmul.mubr.f32.gmra.mrb[0].mxu0 %v628
    %v1496 = vpop.f32.mrb[0].mxu0
    %v1497 = vadd.f32 %v499, %v1496
    %v1498 = vpop.f32.mrb[0].mxu0
    %1499 = vdwg.mxu0
    %v1500 = vsel %vm512, %v1492, -inf
    %1501 = vmax.xlane.f32.xlu0 %v1500
    %v1502 = vpop.xlane.xlu0 %1501
    %v1503 = vsel %vm512, %v1497, -inf
    %1504 = vmax.xlane.f32.xlu0 %v1503
    %v1505 = vpop.xlane.xlu0 %1504
    %v1506 = vsub.f32 %v1492, %v1502
    %v1507 = vsub.f32 %v1497, %v1505
    %v1508 = vmul.f32 %v1506, 1.442695
    %v1509 = vpow.pop %v1508
    %v1510 = vmul.f32 %v1507, 1.442695
    %v1511 = vpow.pop %v1510
    %v1512 = vsel %vm512, %v1509, 0.0
    %1513 = vadd.xlane.f32.xlu0 %v1512
    %v1514 = vpop.xlane.xlu0 %1513
    %v1515 = vsel %vm512, %v1511, 0.0
    %1516 = vadd.xlane.f32.xlu0 %v1515
    %v1517 = vpop.xlane.xlu0 %1516
    %v1518 = vrcp.pop %v1514
    %v1519 = vrcp.pop %v1517
    %v1520 = vmul.f32 %v1509, %v1518
    %v1521 = vmul.f32 %v1511, %v1519
    %v1523 = vsel %vm512, %v1415, 0
    %v1526 = vsel %vm512, %v1416, 0
    %1528 = vmatprep.subr.mxu0 0.0
    %1529 = vmatpush1.msra.mxu0 %v123
    %1530 = vmatprep.subr.mxu0 0.0
    %1531 = vmatpush1.msra.mxu0 %v124
    %1532 = vmatprep.subr.mxu0 0.0
    %1533 = vmatpush1.msra.mxu0 0.0
    %1534 = vmatprep.subr.mxu0 0.0
    %1535 = vmatpush1.msra.mxu0 0.0
    %1536 = vmatprep.subr.mxu0 0.0
    %1537 = vmatpush1.msra.mxu0 0.0
    %1538 = vmatprep.subr.mxu0 0.0
    %1539 = vmatpush1.msra.mxu0 0.0
    %1540 = vmatprep.subr.mxu0 0.0
    %1541 = vmatpush1.msra.mxu0 0.0
    %1542 = vmatprep.subr.mxu0 0.0
    %1543 = vmatpush1.msra.mxu0 0.0
    %1544 = vmatprep.subr.mxu0 0.0
    %1545 = vmatpush1.msra.mxu0 0.0
    %1546 = vmatprep.subr.mxu0 0.0
    %1547 = vmatpush1.msra.mxu0 0.0
    %1548 = vmatprep.subr.mxu0 0.0
    %1549 = vmatpush1.msra.mxu0 0.0
    %1550 = vmatprep.subr.mxu0 0.0
    %1551 = vmatpush1.msra.mxu0 0.0
    %1552 = vmatprep.subr.mxu0 0.0
    %1553 = vmatpush1.msra.mxu0 0.0
    %1554 = vmatprep.subr.mxu0 0.0
    %1555 = vmatpush1.msra.mxu0 0.0
    %1556 = vmatprep.subr.mxu0 0.0
    %1557 = vmatpush1.msra.mxu0 0.0
    %1558 = vmatprep.subr.mxu0 0.0
    %1559 = vmatpush1.msra.mxu0 0.0
    %1560 = vmatprep.subr.mxu0 0.0
    %1561 = vmatpush1.msra.mxu0 0.0
    %1562 = vmatprep.subr.mxu0 0.0
    %1563 = vmatpush1.msra.mxu0 0.0
    %1564 = vmatprep.subr.mxu0 0.0
    %1565 = vmatpush1.msra.mxu0 0.0
    %1566 = vmatprep.subr.mxu0 0.0
    %1567 = vmatpush1.msra.mxu0 0.0
    %1568 = vmatprep.subr.mxu0 0.0
    %1569 = vmatpush1.msra.mxu0 0.0
    %1570 = vmatprep.subr.mxu0 0.0
    %1571 = vmatpush1.msra.mxu0 0.0
    %1572 = vmatprep.subr.mxu0 0.0
    %1573 = vmatpush1.msra.mxu0 0.0
    %1574 = vmatprep.subr.mxu0 0.0
    %1575 = vmatpush1.msra.mxu0 0.0
    %1576 = vmatprep.subr.mxu0 0.0
    %1577 = vmatpush1.msra.mxu0 0.0
    %1578 = vmatprep.subr.mxu0 0.0
    %1579 = vmatpush1.msra.mxu0 0.0
    %1580 = vmatprep.subr.mxu0 0.0
    %1581 = vmatpush1.msra.mxu0 0.0
    %1582 = vmatprep.subr.mxu0 0.0
    %1583 = vmatpush1.msra.mxu0 0.0
    %1584 = vmatprep.subr.mxu0 0.0
    %1585 = vmatpush1.msra.mxu0 0.0
    %1586 = vmatprep.subr.mxu0 0.0
    %1587 = vmatpush1.msra.mxu0 0.0
    %1588 = vmatprep.subr.mxu0 0.0
    %1589 = vmatpush1.msra.mxu0 0.0
    %1590 = vmatprep.subr.mxu0 0.0
    %1591 = vmatpush1.msra.mxu0 0.0
    %1592 = vmatprep.mubr.f32.mxu0 0.0
    %1593 = vmatmul.mubr.f32.gmra.mrb[0].mxu0 %v1523
    %v1594 = vpop.f32.mrb[0].mxu0
    %v1595 = vadd.f32 0.0, %v1594
    %v1596 = vpop.f32.mrb[0].mxu0
    %1597 = vmatprep.mubr.f32.mxu0 0.0
    %1598 = vmatmul.mubr.f32.gmra.mrb[0].mxu0 %v1526
    %v1599 = vpop.f32.mrb[0].mxu0
    %v1600 = vadd.f32 0.0, %v1599
    %v1601 = vpop.f32.mrb[0].mxu0
    %1602 = vdwg.mxu0
    %v1604 = vsel %vm512, %v1520, 0
    %v1607 = vsel %vm512, %v1521, 0
    %1609 = vmatprep.subr.mxu0 0.0
    %1610 = vmatpush1.msra.mxu0 %v123
    %1611 = vmatprep.subr.mxu0 0.0
    %1612 = vmatpush1.msra.mxu0 %v124
    %1613 = vmatprep.subr.mxu0 0.0
    %1614 = vmatpush1.msra.mxu0 0.0
    %1615 = vmatprep.subr.mxu0 0.0
    %1616 = vmatpush1.msra.mxu0 0.0
    %1617 = vmatprep.subr.mxu0 0.0
    %1618 = vmatpush1.msra.mxu0 0.0
    %1619 = vmatprep.subr.mxu0 0.0
    %1620 = vmatpush1.msra.mxu0 0.0
    %1621 = vmatprep.subr.mxu0 0.0
    %1622 = vmatpush1.msra.mxu0 0.0
    %1623 = vmatprep.subr.mxu0 0.0
    %1624 = vmatpush1.msra.mxu0 0.0
    %1625 = vmatprep.subr.mxu0 0.0
    %1626 = vmatpush1.msra.mxu0 0.0
    %1627 = vmatprep.subr.mxu0 0.0
    %1628 = vmatpush1.msra.mxu0 0.0
    %1629 = vmatprep.subr.mxu0 0.0
    %1630 = vmatpush1.msra.mxu0 0.0
    %1631 = vmatprep.subr.mxu0 0.0
    %1632 = vmatpush1.msra.mxu0 0.0
    %1633 = vmatprep.subr.mxu0 0.0
    %1634 = vmatpush1.msra.mxu0 0.0
    %1635 = vmatprep.subr.mxu0 0.0
    %1636 = vmatpush1.msra.mxu0 0.0
    %1637 = vmatprep.subr.mxu0 0.0
    %1638 = vmatpush1.msra.mxu0 0.0
    %1639 = vmatprep.subr.mxu0 0.0
    %1640 = vmatpush1.msra.mxu0 0.0
    %1641 = vmatprep.subr.mxu0 0.0
    %1642 = vmatpush1.msra.mxu0 0.0
    %1643 = vmatprep.subr.mxu0 0.0
    %1644 = vmatpush1.msra.mxu0 0.0
    %1645 = vmatprep.subr.mxu0 0.0
    %1646 = vmatpush1.msra.mxu0 0.0
    %1647 = vmatprep.subr.mxu0 0.0
    %1648 = vmatpush1.msra.mxu0 0.0
    %1649 = vmatprep.subr.mxu0 0.0
    %1650 = vmatpush1.msra.mxu0 0.0
    %1651 = vmatprep.subr.mxu0 0.0
    %1652 = vmatpush1.msra.mxu0 0.0
    %1653 = vmatprep.subr.mxu0 0.0
    %1654 = vmatpush1.msra.mxu0 0.0
    %1655 = vmatprep.subr.mxu0 0.0
    %1656 = vmatpush1.msra.mxu0 0.0
    %1657 = vmatprep.subr.mxu0 0.0
    %1658 = vmatpush1.msra.mxu0 0.0
    %1659 = vmatprep.subr.mxu0 0.0
    %1660 = vmatpush1.msra.mxu0 0.0
    %1661 = vmatprep.subr.mxu0 0.0
    %1662 = vmatpush1.msra.mxu0 0.0
    %1663 = vmatprep.subr.mxu0 0.0
    %1664 = vmatpush1.msra.mxu0 0.0
    %1665 = vmatprep.subr.mxu0 0.0
    %1666 = vmatpush1.msra.mxu0 0.0
    %1667 = vmatprep.subr.mxu0 0.0
    %1668 = vmatpush1.msra.mxu0 0.0
    %1669 = vmatprep.subr.mxu0 0.0
    %1670 = vmatpush1.msra.mxu0 0.0
    %1671 = vmatprep.subr.mxu0 0.0
    %1672 = vmatpush1.msra.mxu0 0.0
    %1673 = vmatprep.mubr.f32.mxu0 0.0
    %1674 = vmatmul.mubr.f32.gmra.mrb[0].mxu0 %v1604
    %v1675 = vpop.f32.mrb[0].mxu0
    %v1676 = vadd.f32 0.0, %v1675
    %v1677 = vpop.f32.mrb[0].mxu0
    %1678 = vmatprep.mubr.f32.mxu0 0.0
    %1679 = vmatmul.mubr.f32.gmra.mrb[0].mxu0 %v1607
    %v1680 = vpop.f32.mrb[0].mxu0
    %v1681 = vadd.f32 0.0, %v1680
    %v1682 = vpop.f32.mrb[0].mxu0
    %1683 = vdwg.mxu0
    %v1684 = vsel %vm889, %v1595, %v1676
    %v1685 = vsel %vm889, %v1600, %v1681
    %1688 = vrot.lane.b32.xlu0 %v470, 96
    %v1689 = vpop.permute.xlu0 %1688
    %1690 = vrot.lane.b32.xlu0 %v471, 96
    %v1691 = vpop.permute.xlu0 %1690
    %v1694 = vadd.f32 %v1684, %v1689
    %v1695 = vadd.f32 %v1685, %v1691
    %1698 = vrot.lane.b32.xlu0 %v490, 124
    %v1699 = vpop.permute.xlu0 %1698
    %1700 = vrot.lane.b32.xlu0 %v491, 124
    %v1701 = vpop.permute.xlu0 %1700
    %1704 = vmatprep.subr.mxu0 0.0
    %1705 = vmatpush1.msra.mxu0 %v1699
    %1706 = vmatprep.subr.mxu0 0.0
    %1707 = vmatpush1.msra.mxu0 %v1701
    %1708 = vmatprep.subr.mxu0 0.0
    %1709 = vmatpush1.msra.mxu0 0.0
    %1710 = vmatprep.subr.mxu0 0.0
    %1711 = vmatpush1.msra.mxu0 0.0
    %1712 = vmatprep.subr.mxu0 0.0
    %1713 = vmatpush1.msra.mxu0 0.0
    %1714 = vmatprep.subr.mxu0 0.0
    %1715 = vmatpush1.msra.mxu0 0.0
    %1716 = vmatprep.subr.mxu0 0.0
    %1717 = vmatpush1.msra.mxu0 0.0
    %1718 = vmatprep.subr.mxu0 0.0
    %1719 = vmatpush1.msra.mxu0 0.0
    %1720 = vmatprep.subr.mxu0 0.0
    %1721 = vmatpush1.msra.mxu0 0.0
    %1722 = vmatprep.subr.mxu0 0.0
    %1723 = vmatpush1.msra.mxu0 0.0
    %1724 = vmatprep.subr.mxu0 0.0
    %1725 = vmatpush1.msra.mxu0 0.0
    %1726 = vmatprep.subr.mxu0 0.0
    %1727 = vmatpush1.msra.mxu0 0.0
    %1728 = vmatprep.subr.mxu0 0.0
    %1729 = vmatpush1.msra.mxu0 0.0
    %1730 = vmatprep.subr.mxu0 0.0
    %1731 = vmatpush1.msra.mxu0 0.0
    %1732 = vmatprep.subr.mxu0 0.0
    %1733 = vmatpush1.msra.mxu0 0.0
    %1734 = vmatprep.subr.mxu0 0.0
    %1735 = vmatpush1.msra.mxu0 0.0
    %1736 = vmatprep.subr.mxu0 0.0
    %1737 = vmatpush1.msra.mxu0 0.0
    %1738 = vmatprep.subr.mxu0 0.0
    %1739 = vmatpush1.msra.mxu0 0.0
    %1740 = vmatprep.subr.mxu0 0.0
    %1741 = vmatpush1.msra.mxu0 0.0
    %1742 = vmatprep.subr.mxu0 0.0
    %1743 = vmatpush1.msra.mxu0 0.0
    %1744 = vmatprep.subr.mxu0 0.0
    %1745 = vmatpush1.msra.mxu0 0.0
    %1746 = vmatprep.subr.mxu0 0.0
    %1747 = vmatpush1.msra.mxu0 0.0
    %1748 = vmatprep.subr.mxu0 0.0
    %1749 = vmatpush1.msra.mxu0 0.0
    %1750 = vmatprep.subr.mxu0 0.0
    %1751 = vmatpush1.msra.mxu0 0.0
    %1752 = vmatprep.subr.mxu0 0.0
    %1753 = vmatpush1.msra.mxu0 0.0
    %1754 = vmatprep.subr.mxu0 0.0
    %1755 = vmatpush1.msra.mxu0 0.0
    %1756 = vmatprep.subr.mxu0 0.0
    %1757 = vmatpush1.msra.mxu0 0.0
    %1758 = vmatprep.subr.mxu0 0.0
    %1759 = vmatpush1.msra.mxu0 0.0
    %1760 = vmatprep.subr.mxu0 0.0
    %1761 = vmatpush1.msra.mxu0 0.0
    %1762 = vmatprep.subr.mxu0 0.0
    %1763 = vmatpush1.msra.mxu0 0.0
    %1764 = vmatprep.subr.mxu0 0.0
    %1765 = vmatpush1.msra.mxu0 0.0
    %1766 = vmatprep.subr.mxu0 0.0
    %1767 = vmatpush1.msra.mxu0 0.0
    %1768 = vmatprep.mubr.f32.mxu0 0.0
    %1769 = vmatmul.mubr.f32.gmra.mrb[0].mxu0 %v917
    %v1770 = vpop.f32.mrb[0].mxu0
    %v1771 = vadd.f32 %v906, %v1770
    %v1772 = vpop.f32.mrb[0].mxu0
    %1773 = vmatprep.mubr.f32.mxu0 0.0
    %1774 = vmatmul.mubr.f32.gmra.mrb[0].mxu0 %v920
    %v1775 = vpop.f32.mrb[0].mxu0
    %v1776 = vadd.f32 %v906, %v1775
    %v1777 = vpop.f32.mrb[0].mxu0
    %1778 = vdwg.mxu0
    %v1779 = vxor.u32 %v1771, 2147483648
    %v1780 = vxor.u32 %v1776, 2147483648
    %v1781 = vmul.f32 %v1779, 1.442695
    %v1782 = vpow.pop %v1781
    %v1783 = vmul.f32 %v1780, 1.442695
    %v1784 = vpow.pop %v1783
    %v1785 = vadd.f32 %v1782, 1.0
    %v1786 = vadd.f32 %v1784, 1.0
    %v1787 = vrcp.pop %v1785
    %v1788 = vmul.f32 1.0, %v1787
    %v1789 = vrcp.pop %v1786
    %v1790 = vmul.f32 1.0, %v1789
    %1791 = vrot.lane.b32.xlu0 %v490, 120
    %v1792 = vpop.permute.xlu0 %1791
    %1793 = vrot.lane.b32.xlu0 %v491, 120
    %v1794 = vpop.permute.xlu0 %1793
    %1797 = vmatprep.subr.mxu0 0.0
    %1798 = vmatpush1.msra.mxu0 %v1792
    %1799 = vmatprep.subr.mxu0 0.0
    %1800 = vmatpush1.msra.mxu0 %v1794
    %1801 = vmatprep.subr.mxu0 0.0
    %1802 = vmatpush1.msra.mxu0 0.0
    %1803 = vmatprep.subr.mxu0 0.0
    %1804 = vmatpush1.msra.mxu0 0.0
    %1805 = vmatprep.subr.mxu0 0.0
    %1806 = vmatpush1.msra.mxu0 0.0
    %1807 = vmatprep.subr.mxu0 0.0
    %1808 = vmatpush1.msra.mxu0 0.0
    %1809 = vmatprep.subr.mxu0 0.0
    %1810 = vmatpush1.msra.mxu0 0.0
    %1811 = vmatprep.subr.mxu0 0.0
    %1812 = vmatpush1.msra.mxu0 0.0
    %1813 = vmatprep.subr.mxu0 0.0
    %1814 = vmatpush1.msra.mxu0 0.0
    %1815 = vmatprep.subr.mxu0 0.0
    %1816 = vmatpush1.msra.mxu0 0.0
    %1817 = vmatprep.subr.mxu0 0.0
    %1818 = vmatpush1.msra.mxu0 0.0
    %1819 = vmatprep.subr.mxu0 0.0
    %1820 = vmatpush1.msra.mxu0 0.0
    %1821 = vmatprep.subr.mxu0 0.0
    %1822 = vmatpush1.msra.mxu0 0.0
    %1823 = vmatprep.subr.mxu0 0.0
    %1824 = vmatpush1.msra.mxu0 0.0
    %1825 = vmatprep.subr.mxu0 0.0
    %1826 = vmatpush1.msra.mxu0 0.0
    %1827 = vmatprep.subr.mxu0 0.0
    %1828 = vmatpush1.msra.mxu0 0.0
    %1829 = vmatprep.subr.mxu0 0.0
    %1830 = vmatpush1.msra.mxu0 0.0
    %1831 = vmatprep.subr.mxu0 0.0
    %1832 = vmatpush1.msra.mxu0 0.0
    %1833 = vmatprep.subr.mxu0 0.0
    %1834 = vmatpush1.msra.mxu0 0.0
    %1835 = vmatprep.subr.mxu0 0.0
    %1836 = vmatpush1.msra.mxu0 0.0
    %1837 = vmatprep.subr.mxu0 0.0
    %1838 = vmatpush1.msra.mxu0 0.0
    %1839 = vmatprep.subr.mxu0 0.0
    %1840 = vmatpush1.msra.mxu0 0.0
    %1841 = vmatprep.subr.mxu0 0.0
    %1842 = vmatpush1.msra.mxu0 0.0
    %1843 = vmatprep.subr.mxu0 0.0
    %1844 = vmatpush1.msra.mxu0 0.0
    %1845 = vmatprep.subr.mxu0 0.0
    %1846 = vmatpush1.msra.mxu0 0.0
    %1847 = vmatprep.subr.mxu0 0.0
    %1848 = vmatpush1.msra.mxu0 0.0
    %1849 = vmatprep.subr.mxu0 0.0
    %1850 = vmatpush1.msra.mxu0 0.0
    %1851 = vmatprep.subr.mxu0 0.0
    %1852 = vmatpush1.msra.mxu0 0.0
    %1853 = vmatprep.subr.mxu0 0.0
    %1854 = vmatpush1.msra.mxu0 0.0
    %1855 = vmatprep.subr.mxu0 0.0
    %1856 = vmatpush1.msra.mxu0 0.0
    %1857 = vmatprep.subr.mxu0 0.0
    %1858 = vmatpush1.msra.mxu0 0.0
    %1859 = vmatprep.subr.mxu0 0.0
    %1860 = vmatpush1.msra.mxu0 0.0
    %1861 = vmatprep.mubr.f32.mxu0 0.0
    %1862 = vmatmul.mubr.f32.gmra.mrb[0].mxu0 %v1022
    %v1863 = vpop.f32.mrb[0].mxu0
    %v1864 = vadd.f32 %v1013, %v1863
    %v1865 = vpop.f32.mrb[0].mxu0
    %1866 = vmatprep.mubr.f32.mxu0 0.0
    %1867 = vmatmul.mubr.f32.gmra.mrb[0].mxu0 %v1025
    %v1868 = vpop.f32.mrb[0].mxu0
    %v1869 = vadd.f32 %v1013, %v1868
    %v1870 = vpop.f32.mrb[0].mxu0
    %1871 = vdwg.mxu0
    %v1872 = vxor.u32 %v1864, 2147483648
    %v1873 = vxor.u32 %v1869, 2147483648
    %v1874 = vmul.f32 %v1872, 1.442695
    %v1875 = vpow.pop %v1874
    %v1876 = vmul.f32 %v1873, 1.442695
    %v1877 = vpow.pop %v1876
    %v1878 = vadd.f32 %v1875, 1.0
    %v1879 = vadd.f32 %v1877, 1.0
    %v1880 = vrcp.pop %v1878
    %v1881 = vmul.f32 1.0, %v1880
    %v1882 = vrcp.pop %v1879
    %v1883 = vmul.f32 1.0, %v1882
    %v1884 = vmul.f32 %v1788, %v127
    %v1885 = vmul.f32 %v1790, %v128
    %v1887 = vsel %vm233, %v1884, 0
    %v1890 = vsel %vm233, %v1885, 0
    %1892 = vmatprep.subr.mxu0 0.0
    %1893 = vmatpush1.msra.mxu0 %v1123
    %1894 = vmatprep.subr.mxu0 0.0
    %1895 = vmatpush1.msra.mxu0 0.0
    %1896 = vmatprep.subr.mxu0 0.0
    %1897 = vmatpush1.msra.mxu0 0.0
    %1898 = vmatprep.subr.mxu0 0.0
    %1899 = vmatpush1.msra.mxu0 0.0
    %1900 = vmatprep.subr.mxu0 0.0
    %1901 = vmatpush1.msra.mxu0 0.0
    %1902 = vmatprep.subr.mxu0 0.0
    %1903 = vmatpush1.msra.mxu0 0.0
    %1904 = vmatprep.subr.mxu0 0.0
    %1905 = vmatpush1.msra.mxu0 0.0
    %1906 = vmatprep.subr.mxu0 0.0
    %1907 = vmatpush1.msra.mxu0 0.0
    %1908 = vmatprep.subr.mxu0 0.0
    %1909 = vmatpush1.msra.mxu0 0.0
    %1910 = vmatprep.subr.mxu0 0.0
    %1911 = vmatpush1.msra.mxu0 0.0
    %1912 = vmatprep.subr.mxu0 0.0
    %1913 = vmatpush1.msra.mxu0 0.0
    %1914 = vmatprep.subr.mxu0 0.0
    %1915 = vmatpush1.msra.mxu0 0.0
    %1916 = vmatprep.subr.mxu0 0.0
    %1917 = vmatpush1.msra.mxu0 0.0
    %1918 = vmatprep.subr.mxu0 0.0
    %1919 = vmatpush1.msra.mxu0 0.0
    %1920 = vmatprep.subr.mxu0 0.0
    %1921 = vmatpush1.msra.mxu0 0.0
    %1922 = vmatprep.subr.mxu0 0.0
    %1923 = vmatpush1.msra.mxu0 0.0
    %1924 = vmatprep.subr.mxu0 0.0
    %1925 = vmatpush1.msra.mxu0 0.0
    %1926 = vmatprep.subr.mxu0 0.0
    %1927 = vmatpush1.msra.mxu0 0.0
    %1928 = vmatprep.subr.mxu0 0.0
    %1929 = vmatpush1.msra.mxu0 0.0
    %1930 = vmatprep.subr.mxu0 0.0
    %1931 = vmatpush1.msra.mxu0 0.0
    %1932 = vmatprep.subr.mxu0 0.0
    %1933 = vmatpush1.msra.mxu0 0.0
    %1934 = vmatprep.subr.mxu0 0.0
    %1935 = vmatpush1.msra.mxu0 0.0
    %1936 = vmatprep.subr.mxu0 0.0
    %1937 = vmatpush1.msra.mxu0 0.0
    %1938 = vmatprep.subr.mxu0 0.0
    %1939 = vmatpush1.msra.mxu0 0.0
    %1940 = vmatprep.subr.mxu0 0.0
    %1941 = vmatpush1.msra.mxu0 0.0
    %1942 = vmatprep.subr.mxu0 0.0
    %1943 = vmatpush1.msra.mxu0 0.0
    %1944 = vmatprep.subr.mxu0 0.0
    %1945 = vmatpush1.msra.mxu0 0.0
    %1946 = vmatprep.subr.mxu0 0.0
    %1947 = vmatpush1.msra.mxu0 0.0
    %1948 = vmatprep.subr.mxu0 0.0
    %1949 = vmatpush1.msra.mxu0 0.0
    %1950 = vmatprep.subr.mxu0 0.0
    %1951 = vmatpush1.msra.mxu0 0.0
    %1952 = vmatprep.subr.mxu0 0.0
    %1953 = vmatpush1.msra.mxu0 0.0
    %1954 = vmatprep.subr.mxu0 0.0
    %1955 = vmatpush1.msra.mxu0 0.0
    %1956 = vmatprep.mubr.f32.mxu0 0.0
    %1957 = vmatmul.mubr.f32.gmra.mrb[0].mxu0 %v1887
    %v1958 = vpop.f32.mrb[0].mxu0
    %v1959 = vadd.f32 0.0, %v1958
    %v1960 = vpop.f32.mrb[0].mxu0
    %1961 = vmatprep.mubr.f32.mxu0 0.0
    %1962 = vmatmul.mubr.f32.gmra.mrb[0].mxu0 %v1890
    %v1963 = vpop.f32.mrb[0].mxu0
    %v1964 = vadd.f32 0.0, %v1963
    %v1965 = vpop.f32.mrb[0].mxu0
    %1966 = vdwg.mxu0
    %1969 = vrot.lane.b32.xlu0 %v1959, 34
    %v1970 = vpop.permute.xlu0 %1969
    %1971 = vrot.lane.b32.xlu0 %v1964, 34
    %v1972 = vpop.permute.xlu0 %1971
    %v1975 = vadd.f32 %v439, %v1970
    %v1976 = vadd.f32 %v444, %v1972
    %1979 = vrot.lane.b32.xlu0 %v1975, 94
    %v1980 = vpop.permute.xlu0 %1979
    %1981 = vrot.lane.b32.xlu0 %v1976, 94
    %v1982 = vpop.permute.xlu0 %1981
    %1985 = vmatprep.subr.mxu0 0.0
    %1986 = vmatpush1.msra.mxu0 %v1980
    %1987 = vmatprep.subr.mxu0 0.0
    %1988 = vmatpush1.msra.mxu0 %v1982
    %1989 = vmatprep.subr.mxu0 0.0
    %1990 = vmatpush1.msra.mxu0 0.0
    %1991 = vmatprep.subr.mxu0 0.0
    %1992 = vmatpush1.msra.mxu0 0.0
    %1993 = vmatprep.subr.mxu0 0.0
    %1994 = vmatpush1.msra.mxu0 0.0
    %1995 = vmatprep.subr.mxu0 0.0
    %1996 = vmatpush1.msra.mxu0 0.0
    %1997 = vmatprep.subr.mxu0 0.0
    %1998 = vmatpush1.msra.mxu0 0.0
    %1999 = vmatprep.subr.mxu0 0.0
    %2000 = vmatpush1.msra.mxu0 0.0
    %2001 = vmatprep.subr.mxu0 0.0
    %2002 = vmatpush1.msra.mxu0 0.0
    %2003 = vmatprep.subr.mxu0 0.0
    %2004 = vmatpush1.msra.mxu0 0.0
    %2005 = vmatprep.subr.mxu0 0.0
    %2006 = vmatpush1.msra.mxu0 0.0
    %2007 = vmatprep.subr.mxu0 0.0
    %2008 = vmatpush1.msra.mxu0 0.0
    %2009 = vmatprep.subr.mxu0 0.0
    %2010 = vmatpush1.msra.mxu0 0.0
    %2011 = vmatprep.subr.mxu0 0.0
    %2012 = vmatpush1.msra.mxu0 0.0
    %2013 = vmatprep.subr.mxu0 0.0
    %2014 = vmatpush1.msra.mxu0 0.0
    %2015 = vmatprep.subr.mxu0 0.0
    %2016 = vmatpush1.msra.mxu0 0.0
    %2017 = vmatprep.subr.mxu0 0.0
    %2018 = vmatpush1.msra.mxu0 0.0
    %2019 = vmatprep.subr.mxu0 0.0
    %2020 = vmatpush1.msra.mxu0 0.0
    %2021 = vmatprep.subr.mxu0 0.0
    %2022 = vmatpush1.msra.mxu0 0.0
    %2023 = vmatprep.subr.mxu0 0.0
    %2024 = vmatpush1.msra.mxu0 0.0
    %2025 = vmatprep.subr.mxu0 0.0
    %2026 = vmatpush1.msra.mxu0 0.0
    %2027 = vmatprep.subr.mxu0 0.0
    %2028 = vmatpush1.msra.mxu0 0.0
    %2029 = vmatprep.subr.mxu0 0.0
    %2030 = vmatpush1.msra.mxu0 0.0
    %2031 = vmatprep.subr.mxu0 0.0
    %2032 = vmatpush1.msra.mxu0 0.0
    %2033 = vmatprep.subr.mxu0 0.0
    %2034 = vmatpush1.msra.mxu0 0.0
    %2035 = vmatprep.subr.mxu0 0.0
    %2036 = vmatpush1.msra.mxu0 0.0
    %2037 = vmatprep.subr.mxu0 0.0
    %2038 = vmatpush1.msra.mxu0 0.0
    %2039 = vmatprep.subr.mxu0 0.0
    %2040 = vmatpush1.msra.mxu0 0.0
    %2041 = vmatprep.subr.mxu0 0.0
    %2042 = vmatpush1.msra.mxu0 0.0
    %2043 = vmatprep.subr.mxu0 0.0
    %2044 = vmatpush1.msra.mxu0 0.0
    %2045 = vmatprep.subr.mxu0 0.0
    %2046 = vmatpush1.msra.mxu0 0.0
    %2047 = vmatprep.subr.mxu0 0.0
    %2048 = vmatpush1.msra.mxu0 0.0
    %2049 = vmatprep.mubr.f32.mxu0 0.0
    %2050 = vmatmul.mubr.f32.gmra.mrb[0].mxu0 %v1225
    %v2051 = vpop.f32.mrb[0].mxu0
    %v2052 = vadd.f32 %v1214, %v2051
    %v2053 = vpop.f32.mrb[0].mxu0
    %2054 = vmatprep.mubr.f32.mxu0 0.0
    %2055 = vmatmul.mubr.f32.gmra.mrb[0].mxu0 %v1228
    %v2056 = vpop.f32.mrb[0].mxu0
    %v2057 = vadd.f32 %v1214, %v2056
    %v2058 = vpop.f32.mrb[0].mxu0
    %2059 = vdwg.mxu0
    %v2060 = vtanh.pop %v2052
    %v2061 = vtanh.pop %v2057
    %v2062 = vmul.f32 %v1881, %v127
    %v2063 = vmul.f32 %v1883, %v128
    %v2064 = vsub.f32 1.0, %v1881
    %v2065 = vsub.f32 1.0, %v1883
    %v2066 = vmul.f32 %v2064, %v2060
    %v2067 = vmul.f32 %v2065, %v2061
    %v2068 = vadd.f32 %v2062, %v2066
    %v2069 = vadd.f32 %v2063, %v2067
    %2070 = vst.msk [vmem:[%s18 + $0x10] sm:$0xff] %vm1315, %v1694
    %2071 = vst.msk [vmem:[%s18 + $0x18] sm:$0xff] %vm1315, %v1695
    %2072 = vst.msk [vmem:[%s19 + $0x10] sm:$0xff] %vm233, %v2068
    %2073 = vst.msk [vmem:[%s19 + $0x18] sm:$0xff] %vm233, %v2069
    // Predicated region
    $region94: #{forward.1} parent=1 // pred_check
      _
    $region95: #{forward.1} parent=1 // pred_check_branch
      %2075 = sbr.rel (0) target = $region97
    $region96: #{forward.1} parent=1 // pred_region
      _
    $region97: #{forward.1} parent=1 // pred_fallthru
      _
    // Predicated region
    $region98: #{forward.1} parent=1 // pred_check
      _
    $region99: #{forward.1} parent=1 // pred_check_branch
      %2077 = sbr.rel (0) target = $region101
    $region100: #{forward.1} parent=1 // pred_region
      _
    $region101: #{forward.1} parent=1 // pred_fallthru
      _
    // Predicated region
    $region102: #{forward.1} parent=1 // pred_check
      _
    $region103: #{forward.1} parent=1 // pred_check_branch
      %2079 = sbr.rel (0) target = $region105
    $region104: #{forward.1} parent=1 // pred_region
      _
    $region105: #{forward.1} parent=1 // pred_fallthru
      _
    // Predicated region
    $region106: #{forward.1} parent=1 // pred_check
      _
    $region107: #{forward.1} parent=1 // pred_check_branch
      %2081 = sbr.rel (0) target = $region109
    $region108: #{forward.1} parent=1 // pred_region
      _
    $region109: #{forward.1} parent=1 // pred_fallthru
      _
    %2082 = vsyncpa [#allocation3], 1
    %2083 = vsyncpa [#allocation5], 1
    %2084 = vsyncpa [#allocation8], 1

</llo_original>
